<compile_context>
chip_gen: v7x
topology: tpu7x:2x2x1
jax: 0.10.0
libtpu: 0.0.40
codegen_flags: <defaults>
</compile_context>

<pallas_src>
import jax
import jax.numpy as jnp
from jax import lax
from jax.experimental import pallas as pl
from jax.experimental.pallas import tpu as pltpu


# ----------------------------------------------------------------------------
# Model dimensions
# ----------------------------------------------------------------------------
STATE_DIM = 6
DEEPSET_LATENT = 8
VAE_LATENT = 16
VAE_HIDDEN = (8, 16)      # reduced VanillaVAE hidden dims for small shapes
IMG = 16                  # depth image is IMG x IMG, in_channels = 1
MLP_HIDDEN = 32           # RLlib FullyConnectedNetwork hidden width (small)
NUM_OUTPUTS = 5           # action: [vx, vy, vz, |v|, wz]
OWN_OBS_DIM = STATE_DIM + VAE_LATENT + DEEPSET_LATENT
OUT_PAD = 128             # lane-dense output slab width


# ----------------------------------------------------------------------------
# Fused Pallas kernel: whole Polkadot forward in one call
# ----------------------------------------------------------------------------
def _polkadot_kernel(
    state_ref, neigh_ref, depth_ref, eps_ref,
    phi_w_ref, phi_b_ref, rho_w_ref, rho_b_ref,
    cw1_ref, cb1_ref, cw2_ref, cb2_ref,
    fc_w_ref, fc_b_ref,
    a1_ws_ref, a1_wz_ref, a1_wd_ref, a1_b_ref,
    w2_ref, b2_ref, w3_ref, b3_ref,
    out_ref,
):
    def dot(a, w_ref):
        # bf16 MXU operands, f32 accumulation.
        return jnp.dot(a.astype(jnp.bfloat16), w_ref[...],
                       preferred_element_type=jnp.float32)

    def lrelu(v):
        return jnp.where(v > 0, v, 0.01 * v)

    # --- DeepSet over neighbors: phi -> ReLU -> permutation-invariant sum -> rho
    phi = jnp.maximum(dot(neigh_ref[...], phi_w_ref) + phi_b_ref[...], 0.0)  # (N, 8)
    pooled = jnp.sum(phi, axis=0, keepdims=True)                             # (1, 8)
    ds_out = dot(pooled, rho_w_ref) + rho_b_ref[...]                         # (1, 8)

    # --- VanillaVAE.encode: conv+BN+LeakyReLU blocks folded to dense matmuls
    h = lrelu(dot(depth_ref[...], cw1_ref) + cb1_ref[...])                   # (1, 512)
    h = lrelu(dot(h, cw2_ref) + cb2_ref[...])                                # (1, 256)

    # --- fc_mu / fc_var fused into one matmul, then reparameterize in-regs
    muvar = dot(h, fc_w_ref) + fc_b_ref[...]                                 # (1, 32)
    mu = muvar[:, :VAE_LATENT]
    log_var = muvar[:, VAE_LATENT:]
    z = mu + eps_ref[...] * jnp.exp(0.5 * log_var)                           # (1, 16)

    # --- action + value heads fused; [state|z|ds] concat avoided by split matmul
    pre1 = (dot(state_ref[...], a1_ws_ref) + dot(z, a1_wz_ref)
            + dot(ds_out, a1_wd_ref) + a1_b_ref[...])                        # (1, 64)
    h1 = jnp.tanh(pre1)
    h2 = jnp.tanh(dot(h1, w2_ref) + b2_ref[...])                             # (1, 64)

    # lane-dense output slab: [:, :5] = action logits, [:, 5] = value
    out_ref[...] = dot(h2, w3_ref) + b3_ref[...]                             # (1, 128)


@jax.jit
def polkadot_forward(kparams, input_state, input_neighbors, depth, eps):
    neigh = input_neighbors.reshape(-1, STATE_DIM).astype(jnp.float32)
    depth_flat = depth.reshape(1, -1).astype(jnp.float32)   # NCHW flatten order
    n_in = 4 + len(kparams)
    out = pl.pallas_call(
        _polkadot_kernel,
        out_shape=jax.ShapeDtypeStruct((1, OUT_PAD), jnp.float32),
        in_specs=[pl.BlockSpec(memory_space=pltpu.MemorySpace.VMEM)] * n_in,
        out_specs=pl.BlockSpec(memory_space=pltpu.MemorySpace.VMEM),
    )(input_state.astype(jnp.float32), neigh, depth_flat,
      eps.astype(jnp.float32), *kparams)
    logits = out[:, :NUM_OUTPUTS]                                 # (1, 5)
    value = out[:, NUM_OUTPUTS:NUM_OUTPUTS + 1].reshape(-1)       # (1,)
    return logits, value


# ----------------------------------------------------------------------------
# Deterministic raw parameters (same construction as the original version)
# ----------------------------------------------------------------------------
def _dense_init(key, fan_in, fan_out):
    kw, kb = jax.random.split(key)
    w = jax.random.normal(kw, (fan_in, fan_out), jnp.float32) / jnp.sqrt(float(fan_in))
    b = 0.01 * jax.random.normal(kb, (fan_out,), jnp.float32)
    return w, b


def init_params(key):
    keys = jax.random.split(key, 16)
    p = {}
    # DeepSet: phi Linear(6, H) + ReLU, sum-pool, rho Linear(H, H)
    p["ds_phi_w"], p["ds_phi_b"] = _dense_init(keys[0], STATE_DIM, DEEPSET_LATENT)
    p["ds_rho_w"], p["ds_rho_b"] = _dense_init(keys[1], DEEPSET_LATENT, DEEPSET_LATENT)
    # VAE encoder: two conv blocks (3x3, s2, p1) + BN + LeakyReLU
    c_prev = 1
    for i, c in enumerate(VAE_HIDDEN):
        kconv = keys[2 + i]
        p[f"conv{i}_w"] = jax.random.normal(kconv, (c, c_prev, 3, 3), jnp.float32) / jnp.sqrt(9.0 * c_prev)
        p[f"conv{i}_b"] = jnp.zeros((c,), jnp.float32)
        p[f"bn{i}_gamma"] = jnp.ones((c,), jnp.float32)
        p[f"bn{i}_beta"] = jnp.zeros((c,), jnp.float32)
        p[f"bn{i}_mean"] = jnp.zeros((c,), jnp.float32)
        p[f"bn{i}_var"] = jnp.ones((c,), jnp.float32)
        c_prev = c
    flat_dim = VAE_HIDDEN[-1] * (IMG // 4) * (IMG // 4)
    p["fc_mu_w"], p["fc_mu_b"] = _dense_init(keys[6], flat_dim, VAE_LATENT)
    p["fc_var_w"], p["fc_var_b"] = _dense_init(keys[7], flat_dim, VAE_LATENT)
    # Action model (FullyConnectedNetwork): 2 tanh hidden layers + linear logits
    p["a_w1"], p["a_b1"] = _dense_init(keys[8], OWN_OBS_DIM, MLP_HIDDEN)
    p["a_w2"], p["a_b2"] = _dense_init(keys[9], MLP_HIDDEN, MLP_HIDDEN)
    p["a_w3"], p["a_b3"] = _dense_init(keys[10], MLP_HIDDEN, NUM_OUTPUTS)
    # Value model: same shape, 1 output
    p["v_w1"], p["v_b1"] = _dense_init(keys[11], OWN_OBS_DIM, MLP_HIDDEN)
    p["v_w2"], p["v_b2"] = _dense_init(keys[12], MLP_HIDDEN, MLP_HIDDEN)
    p["v_w3"], p["v_b3"] = _dense_init(keys[13], MLP_HIDDEN, 1)
    return p


# ----------------------------------------------------------------------------
# One-time folding of the parameters into kernel-ready VMEM weights
# ----------------------------------------------------------------------------
def _conv_bn_as_dense(w, b, gamma, beta, mean, var, in_shape,
                      stride=2, pad=1, bn_eps=1e-5):
    """Exact fold of Conv2d(k3,s2,p1) + eval-BatchNorm into one dense matmul.

    Input/output vectors use NCHW (channel-major) flatten order, matching
    torch.flatten on NCHW tensors, so the fc_mu input ordering is preserved.
    """
    cin, hgt, wid = in_shape
    cout = w.shape[0]
    in_dim = cin * hgt * wid
    eye = jnp.eye(in_dim, dtype=jnp.float32).reshape(in_dim, cin, hgt, wid)
    y = lax.conv_general_dilated(
        eye, w, window_strides=(stride, stride),
        padding=[(pad, pad), (pad, pad)],
        dimension_numbers=("NCHW", "OIHW", "NCHW"))          # (in_dim, cout, oh, ow)
    oh, ow = y.shape[2], y.shape[3]
    a_t = y.reshape(in_dim, cout * oh * ow)                   # pure linear conv map
    scale = gamma / jnp.sqrt(var + bn_eps)                    # (cout,)
    w_dense = a_t * jnp.repeat(scale, oh * ow)[None, :]       # fold BN scale
    b_dense = jnp.repeat(beta + scale * (b - mean), oh * ow)  # fold conv bias + BN
    return w_dense, b_dense.reshape(1, -1), (cout, oh, ow)


def prepare_kernel_params(p):
    bf16 = jnp.bfloat16
    # VAE conv encoder -> two dense layers
    cw1, cb1, shp1 = _conv_bn_as_dense(
        p["conv0_w"], p["conv0_b"], p["bn0_gamma"], p["bn0_beta"],
        p["bn0_mean"], p["bn0_var"], (1, IMG, IMG))
    cw2, cb2, _ = _conv_bn_as_dense(
        p["conv1_w"], p["conv1_b"], p["bn1_gamma"], p["bn1_beta"],
        p["bn1_mean"], p["bn1_var"], shp1)
    # fc_mu / fc_var fused into one (flat_dim, 2*latent) matmul
    fc_w = jnp.concatenate([p["fc_mu_w"], p["fc_var_w"]], axis=1)          # (256, 32)
    fc_b = jnp.concatenate([p["fc_mu_b"], p["fc_var_b"]]).reshape(1, -1)   # (1, 32)
    # action/value heads fused: layer-1 concat over columns, split over input rows
    a1 = jnp.concatenate([p["a_w1"], p["v_w1"]], axis=1)                   # (30, 64)
    a1_ws = a1[:STATE_DIM]                                                 # state rows
    a1_wz = a1[STATE_DIM:STATE_DIM + VAE_LATENT]                           # vae rows
    a1_wd = a1[STATE_DIM + VAE_LATENT:]                                    # deepset rows
    a1_b = jnp.concatenate([p["a_b1"], p["v_b1"]]).reshape(1, -1)          # (1, 64)
    # layer 2: block-diagonal
    w2 = jnp.zeros((2 * MLP_HIDDEN, 2 * MLP_HIDDEN), jnp.float32)
    w2 = w2.at[:MLP_HIDDEN, :MLP_HIDDEN].set(p["a_w2"])
    w2 = w2.at[MLP_HIDDEN:, MLP_HIDDEN:].set(p["v_w2"])
    b2 = jnp.concatenate([p["a_b2"], p["v_b2"]]).reshape(1, -1)            # (1, 64)
    # layer 3: block-diagonal, padded to a lane-dense 128-wide output slab
    w3 = jnp.zeros((2 * MLP_HIDDEN, OUT_PAD), jnp.float32)
    w3 = w3.at[:MLP_HIDDEN, :NUM_OUTPUTS].set(p["a_w3"])
    w3 = w3.at[MLP_HIDDEN:, NUM_OUTPUTS:NUM_OUTPUTS + 1].set(p["v_w3"])
    b3 = jnp.zeros((1, OUT_PAD), jnp.float32)
    b3 = b3.at[0, :NUM_OUTPUTS].set(p["a_b3"])
    b3 = b3.at[0, NUM_OUTPUTS].set(p["v_b3"][0])
    # matmul weights stored bf16 (f32 accumulation in-kernel); biases stay f32
    return (
        p["ds_phi_w"].astype(bf16), p["ds_phi_b"].reshape(1, -1),
        p["ds_rho_w"].astype(bf16), p["ds_rho_b"].reshape(1, -1),
        cw1.astype(bf16), cb1, cw2.astype(bf16), cb2,
        fc_w.astype(bf16), fc_b,
        a1_ws.astype(bf16), a1_wz.astype(bf16), a1_wd.astype(bf16), a1_b,
        w2.astype(bf16), b2, w3.astype(bf16), b3,
    )


# ----------------------------------------------------------------------------
if __name__ == "__main__":
    key = jax.random.PRNGKey(0)
    k_par, k_state, k_neigh, k_depth, k_eps = jax.random.split(key, 5)

    params = init_params(k_par)
    kparams = prepare_kernel_params(params)

    n_neighbors = 3
    input_state = jax.random.normal(k_state, (1, STATE_DIM), jnp.float32)          # state[1:]
    input_neighbors = jax.random.normal(k_neigh, (1, n_neighbors * STATE_DIM), jnp.float32)
    depth = jax.random.normal(k_depth, (1, 1, IMG, IMG), jnp.float32)               # NCHW
    eps = jax.random.normal(k_eps, (1, VAE_LATENT), jnp.float32)                    # reparam noise

    logits, value = polkadot_forward(kparams, input_state, input_neighbors, depth, eps)
    logits = jax.block_until_ready(logits)
    value = jax.block_until_ready(value)

    assert logits.shape == (1, NUM_OUTPUTS)
    assert value.shape == (1,)
    assert bool(jnp.all(jnp.isfinite(logits))) and bool(jnp.all(jnp.isfinite(value)))
    print("KERNEL_OK")
</pallas_src>

<mosaic_0001>
module attributes {stable_mosaic.version = 11 : i64} {
  func.func @_polkadot_kernel(%arg0: memref<1x6xf32, #tpu.memory_space<vmem>>, %arg1: memref<3x6xf32, #tpu.memory_space<vmem>>, %arg2: memref<1x256xf32, #tpu.memory_space<vmem>>, %arg3: memref<1x16xf32, #tpu.memory_space<vmem>>, %arg4: memref<6x8xbf16, #tpu.memory_space<vmem>>, %arg5: memref<1x8xf32, #tpu.memory_space<vmem>>, %arg6: memref<8x8xbf16, #tpu.memory_space<vmem>>, %arg7: memref<1x8xf32, #tpu.memory_space<vmem>>, %arg8: memref<256x512xbf16, #tpu.memory_space<vmem>>, %arg9: memref<1x512xf32, #tpu.memory_space<vmem>>, %arg10: memref<512x256xbf16, #tpu.memory_space<vmem>>, %arg11: memref<1x256xf32, #tpu.memory_space<vmem>>, %arg12: memref<256x32xbf16, #tpu.memory_space<vmem>>, %arg13: memref<1x32xf32, #tpu.memory_space<vmem>>, %arg14: memref<6x64xbf16, #tpu.memory_space<vmem>>, %arg15: memref<16x64xbf16, #tpu.memory_space<vmem>>, %arg16: memref<8x64xbf16, #tpu.memory_space<vmem>>, %arg17: memref<1x64xf32, #tpu.memory_space<vmem>>, %arg18: memref<64x64xbf16, #tpu.memory_space<vmem>>, %arg19: memref<1x64xf32, #tpu.memory_space<vmem>>, %arg20: memref<64x128xbf16, #tpu.memory_space<vmem>>, %arg21: memref<1x128xf32, #tpu.memory_space<vmem>>, %arg22: memref<1x128xf32, #tpu.memory_space<vmem>>) attributes {dimension_semantics = [], scalar_prefetch = 0 : i64, scratch_operands = 0 : i64, tpu.core_type = #tpu.core_type<tc>} {
    %c0 = arith.constant 0 : index
    %c0_0 = arith.constant 0 : index
    %0 = vector.load %arg1[%c0, %c0_0] : memref<3x6xf32, #tpu.memory_space<vmem>>, vector<3x6xf32>
    %1 = arith.truncf %0 : vector<3x6xf32> to vector<3x6xbf16>
    %c0_1 = arith.constant 0 : index
    %c0_2 = arith.constant 0 : index
    %2 = vector.load %arg4[%c0_1, %c0_2] : memref<6x8xbf16, #tpu.memory_space<vmem>>, vector<6x8xbf16>
    %cst = arith.constant dense<0.000000e+00> : vector<3x8xf32>
    %3 = tpu.matmul %1, %2, %cst {dimension_numbers = #tpu.dot_dimension_numbers<[1], [0], [0], [1], [0, 0, 1, 1], [], []>} : vector<3x6xbf16>, vector<6x8xbf16>, vector<3x8xf32> -> vector<3x8xf32>
    %c0_3 = arith.constant 0 : index
    %c0_4 = arith.constant 0 : index
    %4 = vector.load %arg5[%c0_3, %c0_4] : memref<1x8xf32, #tpu.memory_space<vmem>>, vector<1x8xf32>
    %5 = vector.broadcast %4 : vector<1x8xf32> to vector<3x8xf32>
    %6 = arith.addf %3, %5 : vector<3x8xf32>
    %cst_5 = arith.constant 0.000000e+00 : f32
    %7 = vector.broadcast %cst_5 : f32 to vector<3x8xf32>
    %8 = arith.maximumf %6, %7 : vector<3x8xf32>
    %cst_6 = arith.constant dense<0.000000e+00> : vector<8xf32>
    %9 = vector.multi_reduction <add>, %8, %cst_6 [0] : vector<3x8xf32> to vector<8xf32>
    %10 = vector.shape_cast %9 : vector<8xf32> to vector<1x8xf32>
    %11 = arith.truncf %10 : vector<1x8xf32> to vector<1x8xbf16>
    %c0_7 = arith.constant 0 : index
    %c0_8 = arith.constant 0 : index
    %12 = vector.load %arg6[%c0_7, %c0_8] : memref<8x8xbf16, #tpu.memory_space<vmem>>, vector<8x8xbf16>
    %cst_9 = arith.constant dense<0.000000e+00> : vector<1x8xf32>
    %13 = tpu.matmul %11, %12, %cst_9 {dimension_numbers = #tpu.dot_dimension_numbers<[1], [0], [0], [1], [0, 0, 1, 1], [], []>} : vector<1x8xbf16>, vector<8x8xbf16>, vector<1x8xf32> -> vector<1x8xf32>
    %c0_10 = arith.constant 0 : index
    %c0_11 = arith.constant 0 : index
    %14 = vector.load %arg7[%c0_10, %c0_11] : memref<1x8xf32, #tpu.memory_space<vmem>>, vector<1x8xf32>
    %15 = arith.addf %13, %14 : vector<1x8xf32>
    %c0_12 = arith.constant 0 : index
    %c0_13 = arith.constant 0 : index
    %16 = vector.load %arg2[%c0_12, %c0_13] : memref<1x256xf32, #tpu.memory_space<vmem>>, vector<1x256xf32>
    %17 = arith.truncf %16 : vector<1x256xf32> to vector<1x256xbf16>
    %c0_14 = arith.constant 0 : index
    %c0_15 = arith.constant 0 : index
    %18 = vector.load %arg8[%c0_14, %c0_15] : memref<256x512xbf16, #tpu.memory_space<vmem>>, vector<256x512xbf16>
    %cst_16 = arith.constant dense<0.000000e+00> : vector<1x512xf32>
    %19 = tpu.matmul %17, %18, %cst_16 {dimension_numbers = #tpu.dot_dimension_numbers<[1], [0], [0], [1], [0, 0, 1, 1], [], []>} : vector<1x256xbf16>, vector<256x512xbf16>, vector<1x512xf32> -> vector<1x512xf32>
    %c0_17 = arith.constant 0 : index
    %c0_18 = arith.constant 0 : index
    %20 = vector.load %arg9[%c0_17, %c0_18] : memref<1x512xf32, #tpu.memory_space<vmem>>, vector<1x512xf32>
    %21 = arith.addf %19, %20 : vector<1x512xf32>
    %cst_19 = arith.constant 0.000000e+00 : f32
    %22 = vector.broadcast %cst_19 : f32 to vector<1x512xf32>
    %23 = arith.cmpf ogt, %21, %22 : vector<1x512xf32>
    %cst_20 = arith.constant 0.00999999977 : f32
    %24 = vector.broadcast %cst_20 : f32 to vector<1x512xf32>
    %25 = arith.mulf %24, %21 : vector<1x512xf32>
    %26 = arith.select %23, %21, %25 : vector<1x512xi1>, vector<1x512xf32>
    %27 = arith.truncf %26 : vector<1x512xf32> to vector<1x512xbf16>
    %c0_21 = arith.constant 0 : index
    %c0_22 = arith.constant 0 : index
    %28 = vector.load %arg10[%c0_21, %c0_22] : memref<512x256xbf16, #tpu.memory_space<vmem>>, vector<512x256xbf16>
    %cst_23 = arith.constant dense<0.000000e+00> : vector<1x256xf32>
    %29 = tpu.matmul %27, %28, %cst_23 {dimension_numbers = #tpu.dot_dimension_numbers<[1], [0], [0], [1], [0, 0, 1, 1], [], []>} : vector<1x512xbf16>, vector<512x256xbf16>, vector<1x256xf32> -> vector<1x256xf32>
    %c0_24 = arith.constant 0 : index
    %c0_25 = arith.constant 0 : index
    %30 = vector.load %arg11[%c0_24, %c0_25] : memref<1x256xf32, #tpu.memory_space<vmem>>, vector<1x256xf32>
    %31 = arith.addf %29, %30 : vector<1x256xf32>
    %cst_26 = arith.constant 0.000000e+00 : f32
    %32 = vector.broadcast %cst_26 : f32 to vector<1x256xf32>
    %33 = arith.cmpf ogt, %31, %32 : vector<1x256xf32>
    %cst_27 = arith.constant 0.00999999977 : f32
    %34 = vector.broadcast %cst_27 : f32 to vector<1x256xf32>
    %35 = arith.mulf %34, %31 : vector<1x256xf32>
    %36 = arith.select %33, %31, %35 : vector<1x256xi1>, vector<1x256xf32>
    %37 = arith.truncf %36 : vector<1x256xf32> to vector<1x256xbf16>
    %c0_28 = arith.constant 0 : index
    %c0_29 = arith.constant 0 : index
    %38 = vector.load %arg12[%c0_28, %c0_29] : memref<256x32xbf16, #tpu.memory_space<vmem>>, vector<256x32xbf16>
    %cst_30 = arith.constant dense<0.000000e+00> : vector<1x32xf32>
    %39 = tpu.matmul %37, %38, %cst_30 {dimension_numbers = #tpu.dot_dimension_numbers<[1], [0], [0], [1], [0, 0, 1, 1], [], []>} : vector<1x256xbf16>, vector<256x32xbf16>, vector<1x32xf32> -> vector<1x32xf32>
    %c0_31 = arith.constant 0 : index
    %c0_32 = arith.constant 0 : index
    %40 = vector.load %arg13[%c0_31, %c0_32] : memref<1x32xf32, #tpu.memory_space<vmem>>, vector<1x32xf32>
    %41 = arith.addf %39, %40 : vector<1x32xf32>
    %42 = vector.extract_strided_slice %41 {offsets = [0, 0], sizes = [1, 16], strides = [1, 1]} : vector<1x32xf32> to vector<1x16xf32>
    %43 = vector.extract_strided_slice %41 {offsets = [0, 16], sizes = [1, 16], strides = [1, 1]} : vector<1x32xf32> to vector<1x16xf32>
    %c0_33 = arith.constant 0 : index
    %c0_34 = arith.constant 0 : index
    %44 = vector.load %arg3[%c0_33, %c0_34] : memref<1x16xf32, #tpu.memory_space<vmem>>, vector<1x16xf32>
    %cst_35 = arith.constant 5.000000e-01 : f32
    %45 = vector.broadcast %cst_35 : f32 to vector<1x16xf32>
    %46 = arith.mulf %45, %43 : vector<1x16xf32>
    %47 = math.exp %46 : vector<1x16xf32>
    %48 = arith.mulf %44, %47 : vector<1x16xf32>
    %49 = arith.addf %42, %48 : vector<1x16xf32>
    %c0_36 = arith.constant 0 : index
    %c0_37 = arith.constant 0 : index
    %50 = vector.load %arg0[%c0_36, %c0_37] : memref<1x6xf32, #tpu.memory_space<vmem>>, vector<1x6xf32>
    %51 = arith.truncf %50 : vector<1x6xf32> to vector<1x6xbf16>
    %c0_38 = arith.constant 0 : index
    %c0_39 = arith.constant 0 : index
    %52 = vector.load %arg14[%c0_38, %c0_39] : memref<6x64xbf16, #tpu.memory_space<vmem>>, vector<6x64xbf16>
    %cst_40 = arith.constant dense<0.000000e+00> : vector<1x64xf32>
    %53 = tpu.matmul %51, %52, %cst_40 {dimension_numbers = #tpu.dot_dimension_numbers<[1], [0], [0], [1], [0, 0, 1, 1], [], []>} : vector<1x6xbf16>, vector<6x64xbf16>, vector<1x64xf32> -> vector<1x64xf32>
    %54 = arith.truncf %49 : vector<1x16xf32> to vector<1x16xbf16>
    %c0_41 = arith.constant 0 : index
    %c0_42 = arith.constant 0 : index
    %55 = vector.load %arg15[%c0_41, %c0_42] : memref<16x64xbf16, #tpu.memory_space<vmem>>, vector<16x64xbf16>
    %cst_43 = arith.constant dense<0.000000e+00> : vector<1x64xf32>
    %56 = tpu.matmul %54, %55, %cst_43 {dimension_numbers = #tpu.dot_dimension_numbers<[1], [0], [0], [1], [0, 0, 1, 1], [], []>} : vector<1x16xbf16>, vector<16x64xbf16>, vector<1x64xf32> -> vector<1x64xf32>
    %57 = arith.addf %53, %56 : vector<1x64xf32>
    %58 = arith.truncf %15 : vector<1x8xf32> to vector<1x8xbf16>
    %c0_44 = arith.constant 0 : index
    %c0_45 = arith.constant 0 : index
    %59 = vector.load %arg16[%c0_44, %c0_45] : memref<8x64xbf16, #tpu.memory_space<vmem>>, vector<8x64xbf16>
    %cst_46 = arith.constant dense<0.000000e+00> : vector<1x64xf32>
    %60 = tpu.matmul %58, %59, %cst_46 {dimension_numbers = #tpu.dot_dimension_numbers<[1], [0], [0], [1], [0, 0, 1, 1], [], []>} : vector<1x8xbf16>, vector<8x64xbf16>, vector<1x64xf32> -> vector<1x64xf32>
    %61 = arith.addf %57, %60 : vector<1x64xf32>
    %c0_47 = arith.constant 0 : index
    %c0_48 = arith.constant 0 : index
    %62 = vector.load %arg17[%c0_47, %c0_48] : memref<1x64xf32, #tpu.memory_space<vmem>>, vector<1x64xf32>
    %63 = arith.addf %61, %62 : vector<1x64xf32>
    %64 = math.tanh %63 : vector<1x64xf32>
    %65 = arith.truncf %64 : vector<1x64xf32> to vector<1x64xbf16>
    %c0_49 = arith.constant 0 : index
    %c0_50 = arith.constant 0 : index
    %66 = vector.load %arg18[%c0_49, %c0_50] : memref<64x64xbf16, #tpu.memory_space<vmem>>, vector<64x64xbf16>
    %cst_51 = arith.constant dense<0.000000e+00> : vector<1x64xf32>
    %67 = tpu.matmul %65, %66, %cst_51 {dimension_numbers = #tpu.dot_dimension_numbers<[1], [0], [0], [1], [0, 0, 1, 1], [], []>} : vector<1x64xbf16>, vector<64x64xbf16>, vector<1x64xf32> -> vector<1x64xf32>
    %c0_52 = arith.constant 0 : index
    %c0_53 = arith.constant 0 : index
    %68 = vector.load %arg19[%c0_52, %c0_53] : memref<1x64xf32, #tpu.memory_space<vmem>>, vector<1x64xf32>
    %69 = arith.addf %67, %68 : vector<1x64xf32>
    %70 = math.tanh %69 : vector<1x64xf32>
    %71 = arith.truncf %70 : vector<1x64xf32> to vector<1x64xbf16>
    %c0_54 = arith.constant 0 : index
    %c0_55 = arith.constant 0 : index
    %72 = vector.load %arg20[%c0_54, %c0_55] : memref<64x128xbf16, #tpu.memory_space<vmem>>, vector<64x128xbf16>
    %cst_56 = arith.constant dense<0.000000e+00> : vector<1x128xf32>
    %73 = tpu.matmul %71, %72, %cst_56 {dimension_numbers = #tpu.dot_dimension_numbers<[1], [0], [0], [1], [0, 0, 1, 1], [], []>} : vector<1x64xbf16>, vector<64x128xbf16>, vector<1x128xf32> -> vector<1x128xf32>
    %c0_57 = arith.constant 0 : index
    %c0_58 = arith.constant 0 : index
    %74 = vector.load %arg21[%c0_57, %c0_58] : memref<1x128xf32, #tpu.memory_space<vmem>>, vector<1x128xf32>
    %75 = arith.addf %73, %74 : vector<1x128xf32>
    %c0_59 = arith.constant 0 : index
    %c0_60 = arith.constant 0 : index
    %76 = vector.load %arg22[%c0_59, %c0_60] : memref<1x128xf32, #tpu.memory_space<vmem>>, vector<1x128xf32>
    tpu.vector_store %arg22[%c0_59, %c0_60], %75 {strides = array<i32>} : memref<1x128xf32, #tpu.memory_space<vmem>>, vector<1x128xf32>,
    return
  }
}

</mosaic_0001>

<llo_original>
// kernel: polkadot_forward.1
$region0: #{polkadot_forward.1}
  #allocation0 [shape = 'u32[]', space=smem, size = 0x4, offset = 0x4, fixed_abs, tag = 'smem constant byte address 0x4 - core index']
  #allocation1 [shape = 'u32[144,128]{1,0:T(1,128)}', space=vmem, size = 0x12000, scoped, tag = 'internal scratch']
  %s0 = inlined_call_operand.vmem [shape: f32[1,6], index: 0, kind: input, shape index: {}]
  %s1 = inlined_call_operand.vmem [shape: f32[3,6], index: 1, kind: input, shape index: {}]
  %s2 = inlined_call_operand.vmem [shape: f32[1,256], index: 2, kind: input, shape index: {}]
  %s3 = inlined_call_operand.vmem [shape: f32[1,16], index: 3, kind: input, shape index: {}]
  %s4 = inlined_call_operand.vmem [shape: bf16[6,8], index: 4, kind: input, shape index: {}]
  %s5 = inlined_call_operand.vmem [shape: f32[1,8], index: 5, kind: input, shape index: {}]
  %s6 = inlined_call_operand.vmem [shape: bf16[8,8], index: 6, kind: input, shape index: {}]
  %s7 = inlined_call_operand.vmem [shape: f32[1,8], index: 7, kind: input, shape index: {}]
  %s8 = inlined_call_operand.hbm [shape: bf16[256,512], index: 8, kind: input, shape index: {}]
  %s9 = inlined_call_operand.vmem [shape: f32[1,512], index: 9, kind: input, shape index: {}]
  %s10 = inlined_call_operand.hbm [shape: bf16[512,256], index: 10, kind: input, shape index: {}]
  %s11 = inlined_call_operand.vmem [shape: f32[1,256], index: 11, kind: input, shape index: {}]
  %s12 = inlined_call_operand.vmem [shape: bf16[256,32], index: 12, kind: input, shape index: {}]
  %s13 = inlined_call_operand.vmem [shape: f32[1,32], index: 13, kind: input, shape index: {}]
  %s14 = inlined_call_operand.vmem [shape: bf16[6,64], index: 14, kind: input, shape index: {}]
  %s15 = inlined_call_operand.vmem [shape: bf16[16,64], index: 15, kind: input, shape index: {}]
  %s16 = inlined_call_operand.vmem [shape: bf16[8,64], index: 16, kind: input, shape index: {}]
  %s17 = inlined_call_operand.vmem [shape: f32[1,64], index: 17, kind: input, shape index: {}]
  %s18 = inlined_call_operand.vmem [shape: bf16[64,64], index: 18, kind: input, shape index: {}]
  %s19 = inlined_call_operand.vmem [shape: f32[1,64], index: 19, kind: input, shape index: {}]
  %s20 = inlined_call_operand.vmem [shape: bf16[64,128], index: 20, kind: input, shape index: {}]
  %s21 = inlined_call_operand.vmem [shape: f32[1,128], index: 21, kind: input, shape index: {}]
  %s22 = inlined_call_operand.vmem [shape: f32[1,128], index: 22, kind: output, shape index: {}]
  %s23 = sld [smem:[#allocation0]]
  $region106: #{polkadot_forward.1} parent=0
    _
  %s25 = ssub.s32 1, %s23
  %s26 = scalar_select 0, %s25, %s23
  $region1: #{polkadot_forward.1} parent=0
    #allocation2 [shape = 'u8[262144]{0}', space=vmem, size = 0x40000, scoped, tag = 'input window, operand 8, single buffered']
    #allocation3 [shape = 's32[1]{0}', space=sflag, size = 0x4, scoped, tag = 'scoped memory for polkadot_forward.1']
    #allocation4 [shape = 'u8[262144]{0}', space=vmem, size = 0x40000, scoped, tag = 'input window, operand 10, single buffered']
    #allocation5 [shape = 's32[1]{0}', space=sflag, size = 0x4, scoped, tag = 'scoped memory for polkadot_forward.1']
    %27 = vsyncpa [#allocation3], 0
    %28 = vsyncpa [#allocation5], 0
    // Predicated region
    $region2: #{polkadot_forward.1} parent=1 // pred_check
      _
    $region3: #{polkadot_forward.1} parent=1 // pred_check_branch
      %30 = sbr.rel (0) target = $region5
    $region4: #{polkadot_forward.1} parent=1 // pred_region
      _
    $region5: #{polkadot_forward.1} parent=1 // pred_fallthru
      _
    // Predicated region
    $region6: #{polkadot_forward.1} parent=1 // pred_check
      _
    $region7: #{polkadot_forward.1} parent=1 // pred_check_branch
      %32 = sbr.rel (0) target = $region9
    $region8: #{polkadot_forward.1} parent=1 // pred_region
      _
    $region9: #{polkadot_forward.1} parent=1 // pred_fallthru
      _
    // Predicated region
    $region10: #{polkadot_forward.1} parent=1 // pred_check
      _
    $region11: #{polkadot_forward.1} parent=1 // pred_check_branch
      %34 = sbr.rel (0) target = $region13
    $region12: #{polkadot_forward.1} parent=1 // pred_region
      _
    $region13: #{polkadot_forward.1} parent=1 // pred_fallthru
      _
    // Predicated region
    $region14: #{polkadot_forward.1} parent=1 // pred_check
      _
    $region15: #{polkadot_forward.1} parent=1 // pred_check_branch
      %36 = sbr.rel (0) target = $region17
    $region16: #{polkadot_forward.1} parent=1 // pred_region
      _
    $region17: #{polkadot_forward.1} parent=1 // pred_fallthru
      _
    // Predicated region
    $region18: #{polkadot_forward.1} parent=1 // pred_check
      _
    $region19: #{polkadot_forward.1} parent=1 // pred_check_branch
      %38 = sbr.rel (0) target = $region21
    $region20: #{polkadot_forward.1} parent=1 // pred_region
      _
    $region21: #{polkadot_forward.1} parent=1 // pred_fallthru
      _
    // Predicated region
    $region22: #{polkadot_forward.1} parent=1 // pred_check
      _
    $region23: #{polkadot_forward.1} parent=1 // pred_check_branch
      %40 = sbr.rel (0) target = $region25
    $region24: #{polkadot_forward.1} parent=1 // pred_region
      _
    $region25: #{polkadot_forward.1} parent=1 // pred_fallthru
      _
    // Predicated region
    $region26: #{polkadot_forward.1} parent=1 // pred_check
      _
    $region27: #{polkadot_forward.1} parent=1 // pred_check_branch
      %42 = sbr.rel (0) target = $region29
    $region28: #{polkadot_forward.1} parent=1 // pred_region
      _
    $region29: #{polkadot_forward.1} parent=1 // pred_fallthru
      _
    // Predicated region
    $region30: #{polkadot_forward.1} parent=1 // pred_check
      _
    $region31: #{polkadot_forward.1} parent=1 // pred_check_branch
      %44 = sbr.rel (0) target = $region33
    $region32: #{polkadot_forward.1} parent=1 // pred_region
      _
    $region33: #{polkadot_forward.1} parent=1 // pred_fallthru
      _
    // Predicated region
    $region34: #{polkadot_forward.1} parent=1 // pred_check
      _
    $region35: #{polkadot_forward.1} parent=1 // pred_check_branch
      %46 = sbr.rel (0) target = $region37
    $region36: #{polkadot_forward.1} parent=1 // pred_region
      %s48 = ssub.s32 8192, 8192
      %49 = vsyncadd [#allocation3], %s48
      %s50 = sshll.u32 [#allocation2], 4
      %s51 = int_to_ptr.vmem [resolvable:$true] %s50
      %56 = dma.hbm_to_vmem [thread:$0]  %s8, 8192, %s51, [#allocation3], 256, 256, 16
    $region37: #{polkadot_forward.1} parent=1 // pred_fallthru
      _
    // Predicated region
    $region38: #{polkadot_forward.1} parent=1 // pred_check
      _
    $region39: #{polkadot_forward.1} parent=1 // pred_check_branch
      %58 = sbr.rel (0) target = $region41
    $region40: #{polkadot_forward.1} parent=1 // pred_region
      _
    $region41: #{polkadot_forward.1} parent=1 // pred_fallthru
      _
    // Predicated region
    $region42: #{polkadot_forward.1} parent=1 // pred_check
      _
    $region43: #{polkadot_forward.1} parent=1 // pred_check_branch
      %60 = sbr.rel (0) target = $region45
    $region44: #{polkadot_forward.1} parent=1 // pred_region
      %s62 = ssub.s32 8192, 8192
      %63 = vsyncadd [#allocation5], %s62
      %s64 = sshll.u32 [#allocation4], 4
      %s65 = int_to_ptr.vmem [resolvable:$true] %s64
      %70 = dma.hbm_to_vmem [thread:$0]  %s10, 8192, %s65, [#allocation5], 128, 128, 8
    $region45: #{polkadot_forward.1} parent=1 // pred_fallthru
      _
    // Predicated region
    $region46: #{polkadot_forward.1} parent=1 // pred_check
      _
    $region47: #{polkadot_forward.1} parent=1 // pred_check_branch
      %72 = sbr.rel (0) target = $region49
    $region48: #{polkadot_forward.1} parent=1 // pred_region
      _
    $region49: #{polkadot_forward.1} parent=1 // pred_fallthru
      _
    // Predicated region
    $region50: #{polkadot_forward.1} parent=1 // pred_check
      _
    $region51: #{polkadot_forward.1} parent=1 // pred_check_branch
      %74 = sbr.rel (0) target = $region53
    $region52: #{polkadot_forward.1} parent=1 // pred_region
      _
    $region53: #{polkadot_forward.1} parent=1 // pred_fallthru
      _
    // Predicated region
    $region54: #{polkadot_forward.1} parent=1 // pred_check
      _
    $region55: #{polkadot_forward.1} parent=1 // pred_check_branch
      %76 = sbr.rel (0) target = $region57
    $region56: #{polkadot_forward.1} parent=1 // pred_region
      _
    $region57: #{polkadot_forward.1} parent=1 // pred_fallthru
      _
    // Predicated region
    $region58: #{polkadot_forward.1} parent=1 // pred_check
      _
    $region59: #{polkadot_forward.1} parent=1 // pred_check_branch
      %78 = sbr.rel (0) target = $region61
    $region60: #{polkadot_forward.1} parent=1 // pred_region
      _
    $region61: #{polkadot_forward.1} parent=1 // pred_fallthru
      _
    // Predicated region
    $region62: #{polkadot_forward.1} parent=1 // pred_check
      _
    $region63: #{polkadot_forward.1} parent=1 // pred_check_branch
      %80 = sbr.rel (0) target = $region65
    $region64: #{polkadot_forward.1} parent=1 // pred_region
      _
    $region65: #{polkadot_forward.1} parent=1 // pred_fallthru
      _
    // Predicated region
    $region66: #{polkadot_forward.1} parent=1 // pred_check
      _
    $region67: #{polkadot_forward.1} parent=1 // pred_check_branch
      %82 = sbr.rel (0) target = $region69
    $region68: #{polkadot_forward.1} parent=1 // pred_region
      _
    $region69: #{polkadot_forward.1} parent=1 // pred_fallthru
      _
    // Predicated region
    $region70: #{polkadot_forward.1} parent=1 // pred_check
      _
    $region71: #{polkadot_forward.1} parent=1 // pred_check_branch
      %84 = sbr.rel (0) target = $region73
    $region72: #{polkadot_forward.1} parent=1 // pred_region
      _
    $region73: #{polkadot_forward.1} parent=1 // pred_fallthru
      _
    // Predicated region
    $region74: #{polkadot_forward.1} parent=1 // pred_check
      _
    $region75: #{polkadot_forward.1} parent=1 // pred_check_branch
      %86 = sbr.rel (0) target = $region77
    $region76: #{polkadot_forward.1} parent=1 // pred_region
      _
    $region77: #{polkadot_forward.1} parent=1 // pred_fallthru
      _
    // Predicated region
    $region78: #{polkadot_forward.1} parent=1 // pred_check
      _
    $region79: #{polkadot_forward.1} parent=1 // pred_check_branch
      %88 = sbr.rel (0) target = $region81
    $region80: #{polkadot_forward.1} parent=1 // pred_region
      _
    $region81: #{polkadot_forward.1} parent=1 // pred_fallthru
      _
    // Predicated region
    $region82: #{polkadot_forward.1} parent=1 // pred_check
      _
    $region83: #{polkadot_forward.1} parent=1 // pred_check_branch
      %90 = sbr.rel (0) target = $region85
    $region84: #{polkadot_forward.1} parent=1 // pred_region
      _
    $region85: #{polkadot_forward.1} parent=1 // pred_fallthru
      _
    // Predicated region
    $region86: #{polkadot_forward.1} parent=1 // pred_check
      _
    $region87: #{polkadot_forward.1} parent=1 // pred_check_branch
      %92 = sbr.rel (0) target = $region89
    $region88: #{polkadot_forward.1} parent=1 // pred_region
      _
    $region89: #{polkadot_forward.1} parent=1 // pred_fallthru
      _
    // Predicated region
    $region90: #{polkadot_forward.1} parent=1 // pred_check
      _
    $region91: #{polkadot_forward.1} parent=1 // pred_check_branch
      %94 = sbr.rel (0) target = $region93
    $region92: #{polkadot_forward.1} parent=1 // pred_region
      %95 = dma.done [#allocation3], 8192
    $region93: #{polkadot_forward.1} parent=1 // pred_fallthru
      _
    // Predicated region
    $region94: #{polkadot_forward.1} parent=1 // pred_check
      _
    $region95: #{polkadot_forward.1} parent=1 // pred_check_branch
      %97 = sbr.rel (0) target = $region97
    $region96: #{polkadot_forward.1} parent=1 // pred_region
      %98 = dma.done [#allocation5], 8192
    $region97: #{polkadot_forward.1} parent=1 // pred_fallthru
      _
    %v100 = vld [vmem:[%s1] sm:$0x7]
    %v101 = vpack.c.bf16 %v100, %v100
    %v102 = vld [vmem:[%s4] sm:$0x7]
    %v103 = vld [vmem:[%s5] sm:$0x1]
    %v105 = vlaneseq
    %v106 = vshrl.u32 %v105, 7
    %v107 = vsub.s32 0, %v106
    %v108 = vrot.slane %v103, %v107
    %vm110 = vcmask 48128
    %v112 = vsel %vm110, %v101, 0
    %vm114 = vcmask 1042432
    %v116 = vsel %vm114, %v102, 0
    %118 = vmatprep.subr.bf16.mxu0 0
    %119 = vmatpush1.bf16.msra.mxu0 %v116
    %120 = vmatprep.subr.bf16.mxu0 0
    %121 = vmatpush1.bf16.msra.mxu0 0
    %122 = vmatprep.subr.bf16.mxu0 0
    %123 = vmatpush1.bf16.msra.mxu0 0
    %124 = vmatprep.subr.bf16.mxu0 0
    %125 = vmatpush1.bf16.msra.mxu0 0
    %126 = vmatprep.subr.bf16.mxu0 0
    %127 = vmatpush1.bf16.msra.mxu0 0
    %128 = vmatprep.subr.bf16.mxu0 0
    %129 = vmatpush1.bf16.msra.mxu0 0
    %130 = vmatprep.subr.bf16.mxu0 0
    %131 = vmatpush1.bf16.msra.mxu0 0
    %132 = vmatprep.subr.bf16.mxu0 0
    %133 = vmatpush1.bf16.msra.mxu0 0
    %134 = vmatprep.subr.bf16.mxu0 0
    %135 = vmatpush1.bf16.msra.mxu0 0
    %136 = vmatprep.subr.bf16.mxu0 0
    %137 = vmatpush1.bf16.msra.mxu0 0
    %138 = vmatprep.subr.bf16.mxu0 0
    %139 = vmatpush1.bf16.msra.mxu0 0
    %140 = vmatprep.subr.bf16.mxu0 0
    %141 = vmatpush1.bf16.msra.mxu0 0
    %142 = vmatprep.subr.bf16.mxu0 0
    %143 = vmatpush1.bf16.msra.mxu0 0
    %144 = vmatprep.subr.bf16.mxu0 0
    %145 = vmatpush1.bf16.msra.mxu0 0
    %146 = vmatprep.subr.bf16.mxu0 0
    %147 = vmatpush1.bf16.msra.mxu0 0
    %148 = vmatprep.subr.bf16.mxu0 0
    %149 = vmatpush1.bf16.msra.mxu0 0
    %150 = vmatprep.mubr.bf16.mxu0 0
    %151 = vmatmul.mubr.bf16.gmra.mrb[0].mxu0 %v112
    %v152 = vpop.f32.mrb[0].mxu0
    %v153 = vadd.f32 %v108, %v152
    %v154 = vpop.f32.mrb[0].mxu0
    %v155 = vpop.f32.mrb[0].mxu0
    %v156 = vpop.f32.mrb[0].mxu0
    %157 = vdwg.mxu0
    %v158 = vmax.f32 %v153, 0.0
    %vm159 = vcmask 59392
    %v160 = vsel %vm159, %v158, 0.0
    %v161 = vrot.slane %v160, 4
    %v162 = vadd.f32 %v160, %v161
    %v163 = vrot.slane %v162, 2
    %v164 = vadd.f32 %v162, %v163
    %v165 = vrot.slane %v164, 1
    %v166 = vadd.f32 %v164, %v165
    %v167 = vpack.c.bf16 %v166, %v166
    %v168 = vld [vmem:[%s6] sm:$0xf]
    %v169 = vld [vmem:[%s7] sm:$0x1]
    %vm170 = vcmask 64512
    %v172 = vsel %vm170, %v167, 0
    %vm174 = vcmask 1043456
    %v176 = vsel %vm174, %v168, 0
    %178 = vmatprep.subr.bf16.mxu0 0
    %179 = vmatpush1.bf16.msra.mxu0 %v176
    %180 = vmatprep.subr.bf16.mxu0 0
    %181 = vmatpush1.bf16.msra.mxu0 0
    %182 = vmatprep.subr.bf16.mxu0 0
    %183 = vmatpush1.bf16.msra.mxu0 0
    %184 = vmatprep.subr.bf16.mxu0 0
    %185 = vmatpush1.bf16.msra.mxu0 0
    %186 = vmatprep.subr.bf16.mxu0 0
    %187 = vmatpush1.bf16.msra.mxu0 0
    %188 = vmatprep.subr.bf16.mxu0 0
    %189 = vmatpush1.bf16.msra.mxu0 0
    %190 = vmatprep.subr.bf16.mxu0 0
    %191 = vmatpush1.bf16.msra.mxu0 0
    %192 = vmatprep.subr.bf16.mxu0 0
    %193 = vmatpush1.bf16.msra.mxu0 0
    %194 = vmatprep.subr.bf16.mxu0 0
    %195 = vmatpush1.bf16.msra.mxu0 0
    %196 = vmatprep.subr.bf16.mxu0 0
    %197 = vmatpush1.bf16.msra.mxu0 0
    %198 = vmatprep.subr.bf16.mxu0 0
    %199 = vmatpush1.bf16.msra.mxu0 0
    %200 = vmatprep.subr.bf16.mxu0 0
    %201 = vmatpush1.bf16.msra.mxu0 0
    %202 = vmatprep.subr.bf16.mxu0 0
    %203 = vmatpush1.bf16.msra.mxu0 0
    %204 = vmatprep.subr.bf16.mxu0 0
    %205 = vmatpush1.bf16.msra.mxu0 0
    %206 = vmatprep.subr.bf16.mxu0 0
    %207 = vmatpush1.bf16.msra.mxu0 0
    %208 = vmatprep.subr.bf16.mxu0 0
    %209 = vmatpush1.bf16.msra.mxu0 0
    %210 = vmatprep.mubr.bf16.mxu0 0
    %211 = vmatmul.mubr.bf16.gmra.mrb[0].mxu0 %v172
    %v212 = vpop.f32.mrb[0].mxu0
    %v213 = vadd.f32 %v169, %v212
    %v214 = vpop.f32.mrb[0].mxu0
    %v215 = vpop.f32.mrb[0].mxu0
    %v216 = vpop.f32.mrb[0].mxu0
    %217 = vdwg.mxu0
    %v218 = vld [vmem:[%s2] sm:$0x3]
    %v220 = vlaneseq
    %v221 = vshrl.u32 %v220, 7
    %v222 = vsub.s32 0, %v221
    %v223 = vrot.slane %v218, %v222
    %v224 = vlaneseq
    %v225 = vshrl.u32 %v224, 7
    %v226 = vsub.s32 1, %v225
    %v227 = vrot.slane %v218, %v226
    %v230 = vpack.c.bf16 %v223, %v223
    %v231 = vpack.c.bf16 %v227, %v227
    %v232 = vld [vmem:[#allocation2] sm:$0xff]
    %v233 = vld [vmem:[#allocation2 + $0x8] sm:$0xff]
    %v234 = vld [vmem:[#allocation2 + $0x10] sm:$0xff]
    %v235 = vld [vmem:[#allocation2 + $0x18] sm:$0xff]
    %v236 = vld [vmem:[#allocation2 + $0x20] sm:$0xff]
    %v237 = vld [vmem:[#allocation2 + $0x28] sm:$0xff]
    %v238 = vld [vmem:[#allocation2 + $0x30] sm:$0xff]
    %v239 = vld [vmem:[#allocation2 + $0x38] sm:$0xff]
    %v240 = vld [vmem:[#allocation2 + $0x40] sm:$0xff]
    %v241 = vld [vmem:[#allocation2 + $0x48] sm:$0xff]
    %v242 = vld [vmem:[#allocation2 + $0x50] sm:$0xff]
    %v243 = vld [vmem:[#allocation2 + $0x58] sm:$0xff]
    %v244 = vld [vmem:[#allocation2 + $0x60] sm:$0xff]
    %v245 = vld [vmem:[#allocation2 + $0x68] sm:$0xff]
    %v246 = vld [vmem:[#allocation2 + $0x70] sm:$0xff]
    %v247 = vld [vmem:[#allocation2 + $0x78] sm:$0xff]
    %v248 = vld [vmem:[#allocation2 + $0x80] sm:$0xff]
    %v249 = vld [vmem:[#allocation2 + $0x88] sm:$0xff]
    %v250 = vld [vmem:[#allocation2 + $0x90] sm:$0xff]
    %v251 = vld [vmem:[#allocation2 + $0x98] sm:$0xff]
    %v252 = vld [vmem:[#allocation2 + $0xa0] sm:$0xff]
    %v253 = vld [vmem:[#allocation2 + $0xa8] sm:$0xff]
    %v254 = vld [vmem:[#allocation2 + $0xb0] sm:$0xff]
    %v255 = vld [vmem:[#allocation2 + $0xb8] sm:$0xff]
    %v256 = vld [vmem:[#allocation2 + $0xc0] sm:$0xff]
    %v257 = vld [vmem:[#allocation2 + $0xc8] sm:$0xff]
    %v258 = vld [vmem:[#allocation2 + $0xd0] sm:$0xff]
    %v259 = vld [vmem:[#allocation2 + $0xd8] sm:$0xff]
    %v260 = vld [vmem:[#allocation2 + $0xe0] sm:$0xff]
    %v261 = vld [vmem:[#allocation2 + $0xe8] sm:$0xff]
    %v262 = vld [vmem:[#allocation2 + $0xf0] sm:$0xff]
    %v263 = vld [vmem:[#allocation2 + $0xf8] sm:$0xff]
    %v264 = vld [vmem:[#allocation2 + $0x100] sm:$0xff]
    %v265 = vld [vmem:[#allocation2 + $0x108] sm:$0xff]
    %v266 = vld [vmem:[#allocation2 + $0x110] sm:$0xff]
    %v267 = vld [vmem:[#allocation2 + $0x118] sm:$0xff]
    %v268 = vld [vmem:[#allocation2 + $0x120] sm:$0xff]
    %v269 = vld [vmem:[#allocation2 + $0x128] sm:$0xff]
    %v270 = vld [vmem:[#allocation2 + $0x130] sm:$0xff]
    %v271 = vld [vmem:[#allocation2 + $0x138] sm:$0xff]
    %v272 = vld [vmem:[#allocation2 + $0x140] sm:$0xff]
    %v273 = vld [vmem:[#allocation2 + $0x148] sm:$0xff]
    %v274 = vld [vmem:[#allocation2 + $0x150] sm:$0xff]
    %v275 = vld [vmem:[#allocation2 + $0x158] sm:$0xff]
    %v276 = vld [vmem:[#allocation2 + $0x160] sm:$0xff]
    %v277 = vld [vmem:[#allocation2 + $0x168] sm:$0xff]
    %v278 = vld [vmem:[#allocation2 + $0x170] sm:$0xff]
    %v279 = vld [vmem:[#allocation2 + $0x178] sm:$0xff]
    %v280 = vld [vmem:[#allocation2 + $0x180] sm:$0xff]
    %v281 = vld [vmem:[#allocation2 + $0x188] sm:$0xff]
    %v282 = vld [vmem:[#allocation2 + $0x190] sm:$0xff]
    %v283 = vld [vmem:[#allocation2 + $0x198] sm:$0xff]
    %v284 = vld [vmem:[#allocation2 + $0x1a0] sm:$0xff]
    %v285 = vld [vmem:[#allocation2 + $0x1a8] sm:$0xff]
    %v286 = vld [vmem:[#allocation2 + $0x1b0] sm:$0xff]
    %v287 = vld [vmem:[#allocation2 + $0x1b8] sm:$0xff]
    %v288 = vld [vmem:[#allocation2 + $0x1c0] sm:$0xff]
    %v289 = vld [vmem:[#allocation2 + $0x1c8] sm:$0xff]
    %v290 = vld [vmem:[#allocation2 + $0x1d0] sm:$0xff]
    %v291 = vld [vmem:[#allocation2 + $0x1d8] sm:$0xff]
    %v292 = vld [vmem:[#allocation2 + $0x1e0] sm:$0xff]
    %v293 = vld [vmem:[#allocation2 + $0x1e8] sm:$0xff]
    %v294 = vld [vmem:[#allocation2 + $0x1f0] sm:$0xff]
    %v295 = vld [vmem:[#allocation2 + $0x1f8] sm:$0xff]
    %v296 = vld [vmem:[%s9] sm:$0xf]
    %v361 = vunpack.c.l.b16 %v232
    %v362 = vunpack.c.h.b16 %v232
    %v363 = vunpack.c.l.b16 %v233
    %v364 = vunpack.c.h.b16 %v233
    %v365 = vunpack.c.l.b16 %v234
    %v366 = vunpack.c.h.b16 %v234
    %v367 = vunpack.c.l.b16 %v235
    %v368 = vunpack.c.h.b16 %v235
    %v369 = vunpack.c.l.b16 %v236
    %v370 = vunpack.c.h.b16 %v236
    %v371 = vunpack.c.l.b16 %v237
    %v372 = vunpack.c.h.b16 %v237
    %v373 = vunpack.c.l.b16 %v238
    %v374 = vunpack.c.h.b16 %v238
    %v375 = vunpack.c.l.b16 %v239
    %v376 = vunpack.c.h.b16 %v239
    %v377 = vunpack.c.l.b16 %v240
    %v378 = vunpack.c.h.b16 %v240
    %v379 = vunpack.c.l.b16 %v241
    %v380 = vunpack.c.h.b16 %v241
    %v381 = vunpack.c.l.b16 %v242
    %v382 = vunpack.c.h.b16 %v242
    %v383 = vunpack.c.l.b16 %v243
    %v384 = vunpack.c.h.b16 %v243
    %v385 = vunpack.c.l.b16 %v244
    %v386 = vunpack.c.h.b16 %v244
    %v387 = vunpack.c.l.b16 %v245
    %v388 = vunpack.c.h.b16 %v245
    %v389 = vunpack.c.l.b16 %v246
    %v390 = vunpack.c.h.b16 %v246
    %v391 = vunpack.c.l.b16 %v247
    %v392 = vunpack.c.h.b16 %v247
    %v393 = vunpack.c.l.b16 %v248
    %v394 = vunpack.c.h.b16 %v248
    %v395 = vunpack.c.l.b16 %v249
    %v396 = vunpack.c.h.b16 %v249
    %v397 = vunpack.c.l.b16 %v250
    %v398 = vunpack.c.h.b16 %v250
    %v399 = vunpack.c.l.b16 %v251
    %v400 = vunpack.c.h.b16 %v251
    %v401 = vunpack.c.l.b16 %v252
    %v402 = vunpack.c.h.b16 %v252
    %v403 = vunpack.c.l.b16 %v253
    %v404 = vunpack.c.h.b16 %v253
    %v405 = vunpack.c.l.b16 %v254
    %v406 = vunpack.c.h.b16 %v254
    %v407 = vunpack.c.l.b16 %v255
    %v408 = vunpack.c.h.b16 %v255
    %v409 = vunpack.c.l.b16 %v256
    %v410 = vunpack.c.h.b16 %v256
    %v411 = vunpack.c.l.b16 %v257
    %v412 = vunpack.c.h.b16 %v257
    %v413 = vunpack.c.l.b16 %v258
    %v414 = vunpack.c.h.b16 %v258
    %v415 = vunpack.c.l.b16 %v259
    %v416 = vunpack.c.h.b16 %v259
    %v417 = vunpack.c.l.b16 %v260
    %v418 = vunpack.c.h.b16 %v260
    %v419 = vunpack.c.l.b16 %v261
    %v420 = vunpack.c.h.b16 %v261
    %v421 = vunpack.c.l.b16 %v262
    %v422 = vunpack.c.h.b16 %v262
    %v423 = vunpack.c.l.b16 %v263
    %v424 = vunpack.c.h.b16 %v263
    %v425 = vunpack.c.l.b16 %v264
    %v426 = vunpack.c.h.b16 %v264
    %v427 = vunpack.c.l.b16 %v265
    %v428 = vunpack.c.h.b16 %v265
    %v429 = vunpack.c.l.b16 %v266
    %v430 = vunpack.c.h.b16 %v266
    %v431 = vunpack.c.l.b16 %v267
    %v432 = vunpack.c.h.b16 %v267
    %v433 = vunpack.c.l.b16 %v268
    %v434 = vunpack.c.h.b16 %v268
    %v435 = vunpack.c.l.b16 %v269
    %v436 = vunpack.c.h.b16 %v269
    %v437 = vunpack.c.l.b16 %v270
    %v438 = vunpack.c.h.b16 %v270
    %v439 = vunpack.c.l.b16 %v271
    %v440 = vunpack.c.h.b16 %v271
    %v441 = vunpack.c.l.b16 %v272
    %v442 = vunpack.c.h.b16 %v272
    %v443 = vunpack.c.l.b16 %v273
    %v444 = vunpack.c.h.b16 %v273
    %v445 = vunpack.c.l.b16 %v274
    %v446 = vunpack.c.h.b16 %v274
    %v447 = vunpack.c.l.b16 %v275
    %v448 = vunpack.c.h.b16 %v275
    %v449 = vunpack.c.l.b16 %v276
    %v450 = vunpack.c.h.b16 %v276
    %v451 = vunpack.c.l.b16 %v277
    %v452 = vunpack.c.h.b16 %v277
    %v453 = vunpack.c.l.b16 %v278
    %v454 = vunpack.c.h.b16 %v278
    %v455 = vunpack.c.l.b16 %v279
    %v456 = vunpack.c.h.b16 %v279
    %v457 = vunpack.c.l.b16 %v280
    %v458 = vunpack.c.h.b16 %v280
    %v459 = vunpack.c.l.b16 %v281
    %v460 = vunpack.c.h.b16 %v281
    %v461 = vunpack.c.l.b16 %v282
    %v462 = vunpack.c.h.b16 %v282
    %v463 = vunpack.c.l.b16 %v283
    %v464 = vunpack.c.h.b16 %v283
    %v465 = vunpack.c.l.b16 %v284
    %v466 = vunpack.c.h.b16 %v284
    %v467 = vunpack.c.l.b16 %v285
    %v468 = vunpack.c.h.b16 %v285
    %v469 = vunpack.c.l.b16 %v286
    %v470 = vunpack.c.h.b16 %v286
    %v471 = vunpack.c.l.b16 %v287
    %v472 = vunpack.c.h.b16 %v287
    %v473 = vunpack.c.l.b16 %v288
    %v474 = vunpack.c.h.b16 %v288
    %v475 = vunpack.c.l.b16 %v289
    %v476 = vunpack.c.h.b16 %v289
    %v477 = vunpack.c.l.b16 %v290
    %v478 = vunpack.c.h.b16 %v290
    %v479 = vunpack.c.l.b16 %v291
    %v480 = vunpack.c.h.b16 %v291
    %v481 = vunpack.c.l.b16 %v292
    %v482 = vunpack.c.h.b16 %v292
    %v483 = vunpack.c.l.b16 %v293
    %v484 = vunpack.c.h.b16 %v293
    %v485 = vunpack.c.l.b16 %v294
    %v486 = vunpack.c.h.b16 %v294
    %v487 = vunpack.c.l.b16 %v295
    %v488 = vunpack.c.h.b16 %v295
    %v489 = vpack.c.b16 %v365, %v361
    %v490 = vpack.c.b16 %v366, %v362
    %v491 = vpack.c.b16 %v367, %v363
    %v492 = vpack.c.b16 %v368, %v364
    %v493 = vpack.c.b16 %v373, %v369
    %v494 = vpack.c.b16 %v374, %v370
    %v495 = vpack.c.b16 %v375, %v371
    %v496 = vpack.c.b16 %v376, %v372
    %v497 = vpack.c.b16 %v381, %v377
    %v498 = vpack.c.b16 %v382, %v378
    %v499 = vpack.c.b16 %v383, %v379
    %v500 = vpack.c.b16 %v384, %v380
    %v501 = vpack.c.b16 %v389, %v385
    %v502 = vpack.c.b16 %v390, %v386
    %v503 = vpack.c.b16 %v391, %v387
    %v504 = vpack.c.b16 %v392, %v388
    %v505 = vpack.c.b16 %v397, %v393
    %v506 = vpack.c.b16 %v398, %v394
    %v507 = vpack.c.b16 %v399, %v395
    %v508 = vpack.c.b16 %v400, %v396
    %v509 = vpack.c.b16 %v405, %v401
    %v510 = vpack.c.b16 %v406, %v402
    %v511 = vpack.c.b16 %v407, %v403
    %v512 = vpack.c.b16 %v408, %v404
    %v513 = vpack.c.b16 %v413, %v409
    %v514 = vpack.c.b16 %v414, %v410
    %v515 = vpack.c.b16 %v415, %v411
    %v516 = vpack.c.b16 %v416, %v412
    %v517 = vpack.c.b16 %v421, %v417
    %v518 = vpack.c.b16 %v422, %v418
    %v519 = vpack.c.b16 %v423, %v419
    %v520 = vpack.c.b16 %v424, %v420
    %v521 = vpack.c.b16 %v429, %v425
    %v522 = vpack.c.b16 %v430, %v426
    %v523 = vpack.c.b16 %v431, %v427
    %v524 = vpack.c.b16 %v432, %v428
    %v525 = vpack.c.b16 %v437, %v433
    %v526 = vpack.c.b16 %v438, %v434
    %v527 = vpack.c.b16 %v439, %v435
    %v528 = vpack.c.b16 %v440, %v436
    %v529 = vpack.c.b16 %v445, %v441
    %v530 = vpack.c.b16 %v446, %v442
    %v531 = vpack.c.b16 %v447, %v443
    %v532 = vpack.c.b16 %v448, %v444
    %v533 = vpack.c.b16 %v453, %v449
    %v534 = vpack.c.b16 %v454, %v450
    %v535 = vpack.c.b16 %v455, %v451
    %v536 = vpack.c.b16 %v456, %v452
    %v537 = vpack.c.b16 %v461, %v457
    %v538 = vpack.c.b16 %v462, %v458
    %v539 = vpack.c.b16 %v463, %v459
    %v540 = vpack.c.b16 %v464, %v460
    %v541 = vpack.c.b16 %v469, %v465
    %v542 = vpack.c.b16 %v470, %v466
    %v543 = vpack.c.b16 %v471, %v467
    %v544 = vpack.c.b16 %v472, %v468
    %v545 = vpack.c.b16 %v477, %v473
    %v546 = vpack.c.b16 %v478, %v474
    %v547 = vpack.c.b16 %v479, %v475
    %v548 = vpack.c.b16 %v480, %v476
    %v549 = vpack.c.b16 %v485, %v481
    %v550 = vpack.c.b16 %v486, %v482
    %v551 = vpack.c.b16 %v487, %v483
    %v552 = vpack.c.b16 %v488, %v484
    %v618 = vlaneseq
    %v619 = vshrl.u32 %v618, 7
    %v620 = vsub.s32 0, %v619
    %v621 = vrot.slane %v296, %v620
    %v622 = vlaneseq
    %v623 = vshrl.u32 %v622, 7
    %v624 = vsub.s32 1, %v623
    %v625 = vrot.slane %v296, %v624
    %v626 = vlaneseq
    %v627 = vshrl.u32 %v626, 7
    %v628 = vsub.s32 2, %v627
    %v629 = vrot.slane %v296, %v628
    %v630 = vlaneseq
    %v631 = vshrl.u32 %v630, 7
    %v632 = vsub.s32 3, %v631
    %v633 = vrot.slane %v296, %v632
    %638 = vmatprep.subr.bf16.mxu0 %v490
    %639 = vmatpush1.bf16.msra.mxu0 %v489
    %640 = vmatprep.subr.bf16.mxu0 %v494
    %641 = vmatpush1.bf16.msra.mxu0 %v493
    %642 = vmatprep.subr.bf16.mxu0 %v498
    %643 = vmatpush1.bf16.msra.mxu0 %v497
    %644 = vmatprep.subr.bf16.mxu0 %v502
    %645 = vmatpush1.bf16.msra.mxu0 %v501
    %646 = vmatprep.subr.bf16.mxu0 %v506
    %647 = vmatpush1.bf16.msra.mxu0 %v505
    %648 = vmatprep.subr.bf16.mxu0 %v510
    %649 = vmatpush1.bf16.msra.mxu0 %v509
    %650 = vmatprep.subr.bf16.mxu0 %v514
    %651 = vmatpush1.bf16.msra.mxu0 %v513
    %652 = vmatprep.subr.bf16.mxu0 %v518
    %653 = vmatpush1.bf16.msra.mxu0 %v517
    %654 = vmatprep.subr.bf16.mxu0 %v522
    %655 = vmatpush1.bf16.msra.mxu0 %v521
    %656 = vmatprep.subr.bf16.mxu0 %v526
    %657 = vmatpush1.bf16.msra.mxu0 %v525
    %658 = vmatprep.subr.bf16.mxu0 %v530
    %659 = vmatpush1.bf16.msra.mxu0 %v529
    %660 = vmatprep.subr.bf16.mxu0 %v534
    %661 = vmatpush1.bf16.msra.mxu0 %v533
    %662 = vmatprep.subr.bf16.mxu0 %v538
    %663 = vmatpush1.bf16.msra.mxu0 %v537
    %664 = vmatprep.subr.bf16.mxu0 %v542
    %665 = vmatpush1.bf16.msra.mxu0 %v541
    %666 = vmatprep.subr.bf16.mxu0 %v546
    %667 = vmatpush1.bf16.msra.mxu0 %v545
    %668 = vmatprep.subr.bf16.mxu0 %v550
    %669 = vmatpush1.bf16.msra.mxu0 %v549
    %670 = vmatprep.mubr.bf16.mxu0 %v231
    %671 = vmatmul.mubr.bf16.gmra.mrb[0].mxu0 %v230
    %v672 = vpop.f32.mrb[0].mxu0
    %v673 = vadd.f32 %v621, %v672
    %v674 = vpop.f32.mrb[0].mxu0
    %v675 = vadd.f32 %v625, %v674
    %v676 = vpop.f32.mrb[0].mxu0
    %v677 = vpop.f32.mrb[0].mxu0
    %678 = vdwg.mxu0
    %679 = vmatprep.subr.bf16.mxu0 %v492
    %680 = vmatpush1.bf16.msra.mxu0 %v491
    %681 = vmatprep.subr.bf16.mxu0 %v496
    %682 = vmatpush1.bf16.msra.mxu0 %v495
    %683 = vmatprep.subr.bf16.mxu0 %v500
    %684 = vmatpush1.bf16.msra.mxu0 %v499
    %685 = vmatprep.subr.bf16.mxu0 %v504
    %686 = vmatpush1.bf16.msra.mxu0 %v503
    %687 = vmatprep.subr.bf16.mxu0 %v508
    %688 = vmatpush1.bf16.msra.mxu0 %v507
    %689 = vmatprep.subr.bf16.mxu0 %v512
    %690 = vmatpush1.bf16.msra.mxu0 %v511
    %691 = vmatprep.subr.bf16.mxu0 %v516
    %692 = vmatpush1.bf16.msra.mxu0 %v515
    %693 = vmatprep.subr.bf16.mxu0 %v520
    %694 = vmatpush1.bf16.msra.mxu0 %v519
    %695 = vmatprep.subr.bf16.mxu0 %v524
    %696 = vmatpush1.bf16.msra.mxu0 %v523
    %697 = vmatprep.subr.bf16.mxu0 %v528
    %698 = vmatpush1.bf16.msra.mxu0 %v527
    %699 = vmatprep.subr.bf16.mxu0 %v532
    %700 = vmatpush1.bf16.msra.mxu0 %v531
    %701 = vmatprep.subr.bf16.mxu0 %v536
    %702 = vmatpush1.bf16.msra.mxu0 %v535
    %703 = vmatprep.subr.bf16.mxu0 %v540
    %704 = vmatpush1.bf16.msra.mxu0 %v539
    %705 = vmatprep.subr.bf16.mxu0 %v544
    %706 = vmatpush1.bf16.msra.mxu0 %v543
    %707 = vmatprep.subr.bf16.mxu0 %v548
    %708 = vmatpush1.bf16.msra.mxu0 %v547
    %709 = vmatprep.subr.bf16.mxu0 %v552
    %710 = vmatpush1.bf16.msra.mxu0 %v551
    %711 = vmatprep.mubr.bf16.mxu0 %v231
    %712 = vmatmul.mubr.bf16.gmra.mrb[0].mxu0 %v230
    %v713 = vpop.f32.mrb[0].mxu0
    %v714 = vadd.f32 %v629, %v713
    %v715 = vpop.f32.mrb[0].mxu0
    %v716 = vadd.f32 %v633, %v715
    %v717 = vpop.f32.mrb[0].mxu0
    %v718 = vpop.f32.mrb[0].mxu0
    %719 = vdwg.mxu0
    %vm720 = vcmp.gt.f32.partialorder %v673, 0.0
    %vm721 = vcmp.gt.f32.partialorder %v675, 0.0
    %vm722 = vcmp.gt.f32.partialorder %v714, 0.0
    %vm723 = vcmp.gt.f32.partialorder %v716, 0.0
    %v724 = vmul.f32 %v673, 0.01
    %v725 = vmul.f32 %v675, 0.01
    %v726 = vmul.f32 %v714, 0.01
    %v727 = vmul.f32 %v716, 0.01
    %v728 = vsel %vm720, %v673, %v724
    %v729 = vsel %vm721, %v675, %v725
    %v730 = vsel %vm722, %v714, %v726
    %v731 = vsel %vm723, %v716, %v727
    %v732 = vpack.c.bf16 %v728, %v728
    %v733 = vpack.c.bf16 %v729, %v729
    %v734 = vpack.c.bf16 %v730, %v730
    %v735 = vpack.c.bf16 %v731, %v731
    %v736 = vld [vmem:[#allocation4] sm:$0xff]
    %v737 = vld [vmem:[#allocation4 + $0x8] sm:$0xff]
    %v738 = vld [vmem:[#allocation4 + $0x10] sm:$0xff]
    %v739 = vld [vmem:[#allocation4 + $0x18] sm:$0xff]
    %v740 = vld [vmem:[#allocation4 + $0x20] sm:$0xff]
    %v741 = vld [vmem:[#allocation4 + $0x28] sm:$0xff]
    %v742 = vld [vmem:[#allocation4 + $0x30] sm:$0xff]
    %v743 = vld [vmem:[#allocation4 + $0x38] sm:$0xff]
    %v744 = vld [vmem:[#allocation4 + $0x40] sm:$0xff]
    %v745 = vld [vmem:[#allocation4 + $0x48] sm:$0xff]
    %v746 = vld [vmem:[#allocation4 + $0x50] sm:$0xff]
    %v747 = vld [vmem:[#allocation4 + $0x58] sm:$0xff]
    %v748 = vld [vmem:[#allocation4 + $0x60] sm:$0xff]
    %v749 = vld [vmem:[#allocation4 + $0x68] sm:$0xff]
    %v750 = vld [vmem:[#allocation4 + $0x70] sm:$0xff]
    %v751 = vld [vmem:[#allocation4 + $0x78] sm:$0xff]
    %v752 = vld [vmem:[#allocation4 + $0x80] sm:$0xff]
    %v753 = vld [vmem:[#allocation4 + $0x88] sm:$0xff]
    %v754 = vld [vmem:[#allocation4 + $0x90] sm:$0xff]
    %v755 = vld [vmem:[#allocation4 + $0x98] sm:$0xff]
    %v756 = vld [vmem:[#allocation4 + $0xa0] sm:$0xff]
    %v757 = vld [vmem:[#allocation4 + $0xa8] sm:$0xff]
    %v758 = vld [vmem:[#allocation4 + $0xb0] sm:$0xff]
    %v759 = vld [vmem:[#allocation4 + $0xb8] sm:$0xff]
    %v760 = vld [vmem:[#allocation4 + $0xc0] sm:$0xff]
    %v761 = vld [vmem:[#allocation4 + $0xc8] sm:$0xff]
    %v762 = vld [vmem:[#allocation4 + $0xd0] sm:$0xff]
    %v763 = vld [vmem:[#allocation4 + $0xd8] sm:$0xff]
    %v764 = vld [vmem:[#allocation4 + $0xe0] sm:$0xff]
    %v765 = vld [vmem:[#allocation4 + $0xe8] sm:$0xff]
    %v766 = vld [vmem:[#allocation4 + $0xf0] sm:$0xff]
    %v767 = vld [vmem:[#allocation4 + $0xf8] sm:$0xff]
    %v768 = vld [vmem:[#allocation4 + $0x100] sm:$0xff]
    %v769 = vld [vmem:[#allocation4 + $0x108] sm:$0xff]
    %v770 = vld [vmem:[#allocation4 + $0x110] sm:$0xff]
    %v771 = vld [vmem:[#allocation4 + $0x118] sm:$0xff]
    %v772 = vld [vmem:[#allocation4 + $0x120] sm:$0xff]
    %v773 = vld [vmem:[#allocation4 + $0x128] sm:$0xff]
    %v774 = vld [vmem:[#allocation4 + $0x130] sm:$0xff]
    %v775 = vld [vmem:[#allocation4 + $0x138] sm:$0xff]
    %v776 = vld [vmem:[#allocation4 + $0x140] sm:$0xff]
    %v777 = vld [vmem:[#allocation4 + $0x148] sm:$0xff]
    %v778 = vld [vmem:[#allocation4 + $0x150] sm:$0xff]
    %v779 = vld [vmem:[#allocation4 + $0x158] sm:$0xff]
    %v780 = vld [vmem:[#allocation4 + $0x160] sm:$0xff]
    %v781 = vld [vmem:[#allocation4 + $0x168] sm:$0xff]
    %v782 = vld [vmem:[#allocation4 + $0x170] sm:$0xff]
    %v783 = vld [vmem:[#allocation4 + $0x178] sm:$0xff]
    %v784 = vld [vmem:[#allocation4 + $0x180] sm:$0xff]
    %v785 = vld [vmem:[#allocation4 + $0x188] sm:$0xff]
    %v786 = vld [vmem:[#allocation4 + $0x190] sm:$0xff]
    %v787 = vld [vmem:[#allocation4 + $0x198] sm:$0xff]
    %v788 = vld [vmem:[#allocation4 + $0x1a0] sm:$0xff]
    %v789 = vld [vmem:[#allocation4 + $0x1a8] sm:$0xff]
    %v790 = vld [vmem:[#allocation4 + $0x1b0] sm:$0xff]
    %v791 = vld [vmem:[#allocation4 + $0x1b8] sm:$0xff]
    %v792 = vld [vmem:[#allocation4 + $0x1c0] sm:$0xff]
    %v793 = vld [vmem:[#allocation4 + $0x1c8] sm:$0xff]
    %v794 = vld [vmem:[#allocation4 + $0x1d0] sm:$0xff]
    %v795 = vld [vmem:[#allocation4 + $0x1d8] sm:$0xff]
    %v796 = vld [vmem:[#allocation4 + $0x1e0] sm:$0xff]
    %v797 = vld [vmem:[#allocation4 + $0x1e8] sm:$0xff]
    %v798 = vld [vmem:[#allocation4 + $0x1f0] sm:$0xff]
    %v799 = vld [vmem:[#allocation4 + $0x1f8] sm:$0xff]
    %v800 = vld [vmem:[%s11] sm:$0x3]
    %v865 = vunpack.c.l.b16 %v736
    %v866 = vunpack.c.h.b16 %v736
    %v867 = vunpack.c.l.b16 %v737
    %v868 = vunpack.c.h.b16 %v737
    %v869 = vunpack.c.l.b16 %v738
    %v870 = vunpack.c.h.b16 %v738
    %v871 = vunpack.c.l.b16 %v739
    %v872 = vunpack.c.h.b16 %v739
    %v873 = vunpack.c.l.b16 %v740
    %v874 = vunpack.c.h.b16 %v740
    %v875 = vunpack.c.l.b16 %v741
    %v876 = vunpack.c.h.b16 %v741
    %v877 = vunpack.c.l.b16 %v742
    %v878 = vunpack.c.h.b16 %v742
    %v879 = vunpack.c.l.b16 %v743
    %v880 = vunpack.c.h.b16 %v743
    %v881 = vunpack.c.l.b16 %v744
    %v882 = vunpack.c.h.b16 %v744
    %v883 = vunpack.c.l.b16 %v745
    %v884 = vunpack.c.h.b16 %v745
    %v885 = vunpack.c.l.b16 %v746
    %v886 = vunpack.c.h.b16 %v746
    %v887 = vunpack.c.l.b16 %v747
    %v888 = vunpack.c.h.b16 %v747
    %v889 = vunpack.c.l.b16 %v748
    %v890 = vunpack.c.h.b16 %v748
    %v891 = vunpack.c.l.b16 %v749
    %v892 = vunpack.c.h.b16 %v749
    %v893 = vunpack.c.l.b16 %v750
    %v894 = vunpack.c.h.b16 %v750
    %v895 = vunpack.c.l.b16 %v751
    %v896 = vunpack.c.h.b16 %v751
    %v897 = vunpack.c.l.b16 %v752
    %v898 = vunpack.c.h.b16 %v752
    %v899 = vunpack.c.l.b16 %v753
    %v900 = vunpack.c.h.b16 %v753
    %v901 = vunpack.c.l.b16 %v754
    %v902 = vunpack.c.h.b16 %v754
    %v903 = vunpack.c.l.b16 %v755
    %v904 = vunpack.c.h.b16 %v755
    %v905 = vunpack.c.l.b16 %v756
    %v906 = vunpack.c.h.b16 %v756
    %v907 = vunpack.c.l.b16 %v757
    %v908 = vunpack.c.h.b16 %v757
    %v909 = vunpack.c.l.b16 %v758
    %v910 = vunpack.c.h.b16 %v758
    %v911 = vunpack.c.l.b16 %v759
    %v912 = vunpack.c.h.b16 %v759
    %v913 = vunpack.c.l.b16 %v760
    %v914 = vunpack.c.h.b16 %v760
    %v915 = vunpack.c.l.b16 %v761
    %v916 = vunpack.c.h.b16 %v761
    %v917 = vunpack.c.l.b16 %v762
    %v918 = vunpack.c.h.b16 %v762
    %v919 = vunpack.c.l.b16 %v763
    %v920 = vunpack.c.h.b16 %v763
    %v921 = vunpack.c.l.b16 %v764
    %v922 = vunpack.c.h.b16 %v764
    %v923 = vunpack.c.l.b16 %v765
    %v924 = vunpack.c.h.b16 %v765
    %v925 = vunpack.c.l.b16 %v766
    %v926 = vunpack.c.h.b16 %v766
    %v927 = vunpack.c.l.b16 %v767
    %v928 = vunpack.c.h.b16 %v767
    %v929 = vunpack.c.l.b16 %v768
    %v930 = vunpack.c.h.b16 %v768
    %v931 = vunpack.c.l.b16 %v769
    %v932 = vunpack.c.h.b16 %v769
    %v933 = vunpack.c.l.b16 %v770
    %v934 = vunpack.c.h.b16 %v770
    %v935 = vunpack.c.l.b16 %v771
    %v936 = vunpack.c.h.b16 %v771
    %v937 = vunpack.c.l.b16 %v772
    %v938 = vunpack.c.h.b16 %v772
    %v939 = vunpack.c.l.b16 %v773
    %v940 = vunpack.c.h.b16 %v773
    %v941 = vunpack.c.l.b16 %v774
    %v942 = vunpack.c.h.b16 %v774
    %v943 = vunpack.c.l.b16 %v775
    %v944 = vunpack.c.h.b16 %v775
    %v945 = vunpack.c.l.b16 %v776
    %v946 = vunpack.c.h.b16 %v776
    %v947 = vunpack.c.l.b16 %v777
    %v948 = vunpack.c.h.b16 %v777
    %v949 = vunpack.c.l.b16 %v778
    %v950 = vunpack.c.h.b16 %v778
    %v951 = vunpack.c.l.b16 %v779
    %v952 = vunpack.c.h.b16 %v779
    %v953 = vunpack.c.l.b16 %v780
    %v954 = vunpack.c.h.b16 %v780
    %v955 = vunpack.c.l.b16 %v781
    %v956 = vunpack.c.h.b16 %v781
    %v957 = vunpack.c.l.b16 %v782
    %v958 = vunpack.c.h.b16 %v782
    %v959 = vunpack.c.l.b16 %v783
    %v960 = vunpack.c.h.b16 %v783
    %v961 = vunpack.c.l.b16 %v784
    %v962 = vunpack.c.h.b16 %v784
    %v963 = vunpack.c.l.b16 %v785
    %v964 = vunpack.c.h.b16 %v785
    %v965 = vunpack.c.l.b16 %v786
    %v966 = vunpack.c.h.b16 %v786
    %v967 = vunpack.c.l.b16 %v787
    %v968 = vunpack.c.h.b16 %v787
    %v969 = vunpack.c.l.b16 %v788
    %v970 = vunpack.c.h.b16 %v788
    %v971 = vunpack.c.l.b16 %v789
    %v972 = vunpack.c.h.b16 %v789
    %v973 = vunpack.c.l.b16 %v790
    %v974 = vunpack.c.h.b16 %v790
    %v975 = vunpack.c.l.b16 %v791
    %v976 = vunpack.c.h.b16 %v791
    %v977 = vunpack.c.l.b16 %v792
    %v978 = vunpack.c.h.b16 %v792
    %v979 = vunpack.c.l.b16 %v793
    %v980 = vunpack.c.h.b16 %v793
    %v981 = vunpack.c.l.b16 %v794
    %v982 = vunpack.c.h.b16 %v794
    %v983 = vunpack.c.l.b16 %v795
    %v984 = vunpack.c.h.b16 %v795
    %v985 = vunpack.c.l.b16 %v796
    %v986 = vunpack.c.h.b16 %v796
    %v987 = vunpack.c.l.b16 %v797
    %v988 = vunpack.c.h.b16 %v797
    %v989 = vunpack.c.l.b16 %v798
    %v990 = vunpack.c.h.b16 %v798
    %v991 = vunpack.c.l.b16 %v799
    %v992 = vunpack.c.h.b16 %v799
    %v993 = vpack.c.b16 %v867, %v865
    %v994 = vpack.c.b16 %v868, %v866
    %v995 = vpack.c.b16 %v871, %v869
    %v996 = vpack.c.b16 %v872, %v870
    %v997 = vpack.c.b16 %v875, %v873
    %v998 = vpack.c.b16 %v876, %v874
    %v999 = vpack.c.b16 %v879, %v877
    %v1000 = vpack.c.b16 %v880, %v878
    %v1001 = vpack.c.b16 %v883, %v881
    %v1002 = vpack.c.b16 %v884, %v882
    %v1003 = vpack.c.b16 %v887, %v885
    %v1004 = vpack.c.b16 %v888, %v886
    %v1005 = vpack.c.b16 %v891, %v889
    %v1006 = vpack.c.b16 %v892, %v890
    %v1007 = vpack.c.b16 %v895, %v893
    %v1008 = vpack.c.b16 %v896, %v894
    %v1009 = vpack.c.b16 %v899, %v897
    %v1010 = vpack.c.b16 %v900, %v898
    %v1011 = vpack.c.b16 %v903, %v901
    %v1012 = vpack.c.b16 %v904, %v902
    %v1013 = vpack.c.b16 %v907, %v905
    %v1014 = vpack.c.b16 %v908, %v906
    %v1015 = vpack.c.b16 %v911, %v909
    %v1016 = vpack.c.b16 %v912, %v910
    %v1017 = vpack.c.b16 %v915, %v913
    %v1018 = vpack.c.b16 %v916, %v914
    %v1019 = vpack.c.b16 %v919, %v917
    %v1020 = vpack.c.b16 %v920, %v918
    %v1021 = vpack.c.b16 %v923, %v921
    %v1022 = vpack.c.b16 %v924, %v922
    %v1023 = vpack.c.b16 %v927, %v925
    %v1024 = vpack.c.b16 %v928, %v926
    %v1025 = vpack.c.b16 %v931, %v929
    %v1026 = vpack.c.b16 %v932, %v930
    %v1027 = vpack.c.b16 %v935, %v933
    %v1028 = vpack.c.b16 %v936, %v934
    %v1029 = vpack.c.b16 %v939, %v937
    %v1030 = vpack.c.b16 %v940, %v938
    %v1031 = vpack.c.b16 %v943, %v941
    %v1032 = vpack.c.b16 %v944, %v942
    %v1033 = vpack.c.b16 %v947, %v945
    %v1034 = vpack.c.b16 %v948, %v946
    %v1035 = vpack.c.b16 %v951, %v949
    %v1036 = vpack.c.b16 %v952, %v950
    %v1037 = vpack.c.b16 %v955, %v953
    %v1038 = vpack.c.b16 %v956, %v954
    %v1039 = vpack.c.b16 %v959, %v957
    %v1040 = vpack.c.b16 %v960, %v958
    %v1041 = vpack.c.b16 %v963, %v961
    %v1042 = vpack.c.b16 %v964, %v962
    %v1043 = vpack.c.b16 %v967, %v965
    %v1044 = vpack.c.b16 %v968, %v966
    %v1045 = vpack.c.b16 %v971, %v969
    %v1046 = vpack.c.b16 %v972, %v970
    %v1047 = vpack.c.b16 %v975, %v973
    %v1048 = vpack.c.b16 %v976, %v974
    %v1049 = vpack.c.b16 %v979, %v977
    %v1050 = vpack.c.b16 %v980, %v978
    %v1051 = vpack.c.b16 %v983, %v981
    %v1052 = vpack.c.b16 %v984, %v982
    %v1053 = vpack.c.b16 %v987, %v985
    %v1054 = vpack.c.b16 %v988, %v986
    %v1055 = vpack.c.b16 %v991, %v989
    %v1056 = vpack.c.b16 %v992, %v990
    %v1122 = vlaneseq
    %v1123 = vshrl.u32 %v1122, 7
    %v1124 = vsub.s32 0, %v1123
    %v1125 = vrot.slane %v800, %v1124
    %v1126 = vlaneseq
    %v1127 = vshrl.u32 %v1126, 7
    %v1128 = vsub.s32 1, %v1127
    %v1129 = vrot.slane %v800, %v1128
    %1132 = vmatprep.subr.bf16.mxu0 %v994
    %1133 = vmatpush1.bf16.msra.mxu0 %v993
    %1134 = vmatprep.subr.bf16.mxu0 %v996
    %1135 = vmatpush1.bf16.msra.mxu0 %v995
    %1136 = vmatprep.subr.bf16.mxu0 %v998
    %1137 = vmatpush1.bf16.msra.mxu0 %v997
    %1138 = vmatprep.subr.bf16.mxu0 %v1000
    %1139 = vmatpush1.bf16.msra.mxu0 %v999
    %1140 = vmatprep.subr.bf16.mxu0 %v1002
    %1141 = vmatpush1.bf16.msra.mxu0 %v1001
    %1142 = vmatprep.subr.bf16.mxu0 %v1004
    %1143 = vmatpush1.bf16.msra.mxu0 %v1003
    %1144 = vmatprep.subr.bf16.mxu0 %v1006
    %1145 = vmatpush1.bf16.msra.mxu0 %v1005
    %1146 = vmatprep.subr.bf16.mxu0 %v1008
    %1147 = vmatpush1.bf16.msra.mxu0 %v1007
    %1148 = vmatprep.subr.bf16.mxu0 %v1010
    %1149 = vmatpush1.bf16.msra.mxu0 %v1009
    %1150 = vmatprep.subr.bf16.mxu0 %v1012
    %1151 = vmatpush1.bf16.msra.mxu0 %v1011
    %1152 = vmatprep.subr.bf16.mxu0 %v1014
    %1153 = vmatpush1.bf16.msra.mxu0 %v1013
    %1154 = vmatprep.subr.bf16.mxu0 %v1016
    %1155 = vmatpush1.bf16.msra.mxu0 %v1015
    %1156 = vmatprep.subr.bf16.mxu0 %v1018
    %1157 = vmatpush1.bf16.msra.mxu0 %v1017
    %1158 = vmatprep.subr.bf16.mxu0 %v1020
    %1159 = vmatpush1.bf16.msra.mxu0 %v1019
    %1160 = vmatprep.subr.bf16.mxu0 %v1022
    %1161 = vmatpush1.bf16.msra.mxu0 %v1021
    %1162 = vmatprep.subr.bf16.mxu0 %v1024
    %1163 = vmatpush1.bf16.msra.mxu0 %v1023
    %1164 = vmatprep.mubr.bf16.mxu0 %v733
    %1165 = vmatmul.mubr.bf16.gmra.mrb[0].mxu0 %v732
    %v1166 = vpop.f32.mrb[0].mxu0
    %v1167 = vadd.f32 %v1125, %v1166
    %v1168 = vpop.f32.mrb[0].mxu0
    %v1169 = vadd.f32 %v1129, %v1168
    %v1170 = vpop.f32.mrb[0].mxu0
    %v1171 = vpop.f32.mrb[0].mxu0
    %1172 = vdwg.mxu0
    %1173 = vmatprep.subr.bf16.mxu0 %v1026
    %1174 = vmatpush1.bf16.msra.mxu0 %v1025
    %1175 = vmatprep.subr.bf16.mxu0 %v1028
    %1176 = vmatpush1.bf16.msra.mxu0 %v1027
    %1177 = vmatprep.subr.bf16.mxu0 %v1030
    %1178 = vmatpush1.bf16.msra.mxu0 %v1029
    %1179 = vmatprep.subr.bf16.mxu0 %v1032
    %1180 = vmatpush1.bf16.msra.mxu0 %v1031
    %1181 = vmatprep.subr.bf16.mxu0 %v1034
    %1182 = vmatpush1.bf16.msra.mxu0 %v1033
    %1183 = vmatprep.subr.bf16.mxu0 %v1036
    %1184 = vmatpush1.bf16.msra.mxu0 %v1035
    %1185 = vmatprep.subr.bf16.mxu0 %v1038
    %1186 = vmatpush1.bf16.msra.mxu0 %v1037
    %1187 = vmatprep.subr.bf16.mxu0 %v1040
    %1188 = vmatpush1.bf16.msra.mxu0 %v1039
    %1189 = vmatprep.subr.bf16.mxu0 %v1042
    %1190 = vmatpush1.bf16.msra.mxu0 %v1041
    %1191 = vmatprep.subr.bf16.mxu0 %v1044
    %1192 = vmatpush1.bf16.msra.mxu0 %v1043
    %1193 = vmatprep.subr.bf16.mxu0 %v1046
    %1194 = vmatpush1.bf16.msra.mxu0 %v1045
    %1195 = vmatprep.subr.bf16.mxu0 %v1048
    %1196 = vmatpush1.bf16.msra.mxu0 %v1047
    %1197 = vmatprep.subr.bf16.mxu0 %v1050
    %1198 = vmatpush1.bf16.msra.mxu0 %v1049
    %1199 = vmatprep.subr.bf16.mxu0 %v1052
    %1200 = vmatpush1.bf16.msra.mxu0 %v1051
    %1201 = vmatprep.subr.bf16.mxu0 %v1054
    %1202 = vmatpush1.bf16.msra.mxu0 %v1053
    %1203 = vmatprep.subr.bf16.mxu0 %v1056
    %1204 = vmatpush1.bf16.msra.mxu0 %v1055
    %1205 = vmatprep.mubr.bf16.mxu0 %v735
    %1206 = vmatmul.mubr.bf16.gmra.mrb[0].mxu0 %v734
    %v1207 = vpop.f32.mrb[0].mxu0
    %v1208 = vadd.f32 %v1167, %v1207
    %v1209 = vpop.f32.mrb[0].mxu0
    %v1210 = vadd.f32 %v1169, %v1209
    %v1211 = vpop.f32.mrb[0].mxu0
    %v1212 = vpop.f32.mrb[0].mxu0
    %1213 = vdwg.mxu0
    %vm1214 = vcmp.gt.f32.partialorder %v1208, 0.0
    %vm1215 = vcmp.gt.f32.partialorder %v1210, 0.0
    %v1216 = vmul.f32 %v1208, 0.01
    %v1217 = vmul.f32 %v1210, 0.01
    %v1218 = vsel %vm1214, %v1208, %v1216
    %v1219 = vsel %vm1215, %v1210, %v1217
    %v1220 = vpack.c.bf16 %v1218, %v1218
    %v1221 = vpack.c.bf16 %v1219, %v1219
    %v1222 = vld [vmem:[%s12] sm:$0xf]
    %v1223 = vld [vmem:[%s12 + $0x4] sm:$0xf]
    %v1224 = vld [vmem:[%s12 + $0x8] sm:$0xf]
    %v1225 = vld [vmem:[%s12 + $0xc] sm:$0xf]
    %v1226 = vld [vmem:[%s12 + $0x10] sm:$0xf]
    %v1227 = vld [vmem:[%s12 + $0x14] sm:$0xf]
    %v1228 = vld [vmem:[%s12 + $0x18] sm:$0xf]
    %v1229 = vld [vmem:[%s12 + $0x1c] sm:$0xf]
    %v1230 = vld [vmem:[%s12 + $0x20] sm:$0xf]
    %v1231 = vld [vmem:[%s12 + $0x24] sm:$0xf]
    %v1232 = vld [vmem:[%s12 + $0x28] sm:$0xf]
    %v1233 = vld [vmem:[%s12 + $0x2c] sm:$0xf]
    %v1234 = vld [vmem:[%s12 + $0x30] sm:$0xf]
    %v1235 = vld [vmem:[%s12 + $0x34] sm:$0xf]
    %v1236 = vld [vmem:[%s12 + $0x38] sm:$0xf]
    %v1237 = vld [vmem:[%s12 + $0x3c] sm:$0xf]
    %v1238 = vld [vmem:[%s12 + $0x40] sm:$0xf]
    %v1239 = vld [vmem:[%s12 + $0x44] sm:$0xf]
    %v1240 = vld [vmem:[%s12 + $0x48] sm:$0xf]
    %v1241 = vld [vmem:[%s12 + $0x4c] sm:$0xf]
    %v1242 = vld [vmem:[%s12 + $0x50] sm:$0xf]
    %v1243 = vld [vmem:[%s12 + $0x54] sm:$0xf]
    %v1244 = vld [vmem:[%s12 + $0x58] sm:$0xf]
    %v1245 = vld [vmem:[%s12 + $0x5c] sm:$0xf]
    %v1246 = vld [vmem:[%s12 + $0x60] sm:$0xf]
    %v1247 = vld [vmem:[%s12 + $0x64] sm:$0xf]
    %v1248 = vld [vmem:[%s12 + $0x68] sm:$0xf]
    %v1249 = vld [vmem:[%s12 + $0x6c] sm:$0xf]
    %v1250 = vld [vmem:[%s12 + $0x70] sm:$0xf]
    %v1251 = vld [vmem:[%s12 + $0x74] sm:$0xf]
    %v1252 = vld [vmem:[%s12 + $0x78] sm:$0xf]
    %v1253 = vld [vmem:[%s12 + $0x7c] sm:$0xf]
    %v1254 = vld [vmem:[%s13] sm:$0x1]
    %v1287 = vunpack.c.l.b16 %v1222
    %v1288 = vunpack.c.l.b16 %v1223
    %v1289 = vunpack.c.l.b16 %v1224
    %v1290 = vunpack.c.l.b16 %v1225
    %v1291 = vunpack.c.l.b16 %v1226
    %v1292 = vunpack.c.l.b16 %v1227
    %v1293 = vunpack.c.l.b16 %v1228
    %v1294 = vunpack.c.l.b16 %v1229
    %v1295 = vunpack.c.l.b16 %v1230
    %v1296 = vunpack.c.l.b16 %v1231
    %v1297 = vunpack.c.l.b16 %v1232
    %v1298 = vunpack.c.l.b16 %v1233
    %v1299 = vunpack.c.l.b16 %v1234
    %v1300 = vunpack.c.l.b16 %v1235
    %v1301 = vunpack.c.l.b16 %v1236
    %v1302 = vunpack.c.l.b16 %v1237
    %v1303 = vunpack.c.l.b16 %v1238
    %v1304 = vunpack.c.l.b16 %v1239
    %v1305 = vunpack.c.l.b16 %v1240
    %v1306 = vunpack.c.l.b16 %v1241
    %v1307 = vunpack.c.l.b16 %v1242
    %v1308 = vunpack.c.l.b16 %v1243
    %v1309 = vunpack.c.l.b16 %v1244
    %v1310 = vunpack.c.l.b16 %v1245
    %v1311 = vunpack.c.l.b16 %v1246
    %v1312 = vunpack.c.l.b16 %v1247
    %v1313 = vunpack.c.l.b16 %v1248
    %v1314 = vunpack.c.l.b16 %v1249
    %v1315 = vunpack.c.l.b16 %v1250
    %v1316 = vunpack.c.l.b16 %v1251
    %v1317 = vunpack.c.l.b16 %v1252
    %v1318 = vunpack.c.l.b16 %v1253
    %v1319 = vpack.c.b16 %v1288, %v1287
    %v1320 = vpack.c.b16 %v1290, %v1289
    %v1321 = vpack.c.b16 %v1292, %v1291
    %v1322 = vpack.c.b16 %v1294, %v1293
    %v1323 = vpack.c.b16 %v1296, %v1295
    %v1324 = vpack.c.b16 %v1298, %v1297
    %v1325 = vpack.c.b16 %v1300, %v1299
    %v1326 = vpack.c.b16 %v1302, %v1301
    %v1327 = vpack.c.b16 %v1304, %v1303
    %v1328 = vpack.c.b16 %v1306, %v1305
    %v1329 = vpack.c.b16 %v1308, %v1307
    %v1330 = vpack.c.b16 %v1310, %v1309
    %v1331 = vpack.c.b16 %v1312, %v1311
    %v1332 = vpack.c.b16 %v1314, %v1313
    %v1333 = vpack.c.b16 %v1316, %v1315
    %v1334 = vpack.c.b16 %v1318, %v1317
    %1351 = vmatprep.subr.bf16.mxu0 0
    %1352 = vmatpush1.bf16.msra.mxu0 %v1319
    %1353 = vmatprep.subr.bf16.mxu0 0
    %1354 = vmatpush1.bf16.msra.mxu0 %v1320
    %1355 = vmatprep.subr.bf16.mxu0 0
    %1356 = vmatpush1.bf16.msra.mxu0 %v1321
    %1357 = vmatprep.subr.bf16.mxu0 0
    %1358 = vmatpush1.bf16.msra.mxu0 %v1322
    %1359 = vmatprep.subr.bf16.mxu0 0
    %1360 = vmatpush1.bf16.msra.mxu0 %v1323
    %1361 = vmatprep.subr.bf16.mxu0 0
    %1362 = vmatpush1.bf16.msra.mxu0 %v1324
    %1363 = vmatprep.subr.bf16.mxu0 0
    %1364 = vmatpush1.bf16.msra.mxu0 %v1325
    %1365 = vmatprep.subr.bf16.mxu0 0
    %1366 = vmatpush1.bf16.msra.mxu0 %v1326
    %1367 = vmatprep.subr.bf16.mxu0 0
    %1368 = vmatpush1.bf16.msra.mxu0 %v1327
    %1369 = vmatprep.subr.bf16.mxu0 0
    %1370 = vmatpush1.bf16.msra.mxu0 %v1328
    %1371 = vmatprep.subr.bf16.mxu0 0
    %1372 = vmatpush1.bf16.msra.mxu0 %v1329
    %1373 = vmatprep.subr.bf16.mxu0 0
    %1374 = vmatpush1.bf16.msra.mxu0 %v1330
    %1375 = vmatprep.subr.bf16.mxu0 0
    %1376 = vmatpush1.bf16.msra.mxu0 %v1331
    %1377 = vmatprep.subr.bf16.mxu0 0
    %1378 = vmatpush1.bf16.msra.mxu0 %v1332
    %1379 = vmatprep.subr.bf16.mxu0 0
    %1380 = vmatpush1.bf16.msra.mxu0 %v1333
    %1381 = vmatprep.subr.bf16.mxu0 0
    %1382 = vmatpush1.bf16.msra.mxu0 %v1334
    %1383 = vmatprep.mubr.bf16.mxu0 %v1221
    %1384 = vmatmul.mubr.bf16.gmra.mrb[0].mxu0 %v1220
    %v1385 = vpop.f32.mrb[0].mxu0
    %v1386 = vadd.f32 %v1254, %v1385
    %v1387 = vpop.f32.mrb[0].mxu0
    %v1388 = vpop.f32.mrb[0].mxu0
    %v1389 = vpop.f32.mrb[0].mxu0
    %1390 = vdwg.mxu0
    %v1391 = vld [vmem:[%s3] sm:$0x1]
    %v1392 = vmul.f32 %v1386, 0.5
    %v1393 = vmul.f32 %v1392, 1.442695
    %v1394 = vpow.pop %v1393
    %v1397 = vunpack.c.l.s4 1966171168
    %v1398 = vunpack.c.0.s8 %v1397
    %v1399 = vlaneseq
    %v1400 = vshrl.u32 %v1399, 7
    %v1401 = vsub.s32 %v1398, %v1400
    %v1402 = vrot.slane %v1394, %v1401
    %v1404 = vunpack.c.l.s4 1966171168
    %v1405 = vunpack.c.0.s8 %v1404
    %v1406 = vlaneseq
    %v1407 = vshrl.u32 %v1406, 7
    %v1408 = vsub.s32 %v1405, %v1407
    %v1409 = vrot.slane %v1402, %v1408
    %1410 = vrot.lane.b32.xlu0 %v1409, 112
    %v1411 = vpop.permute.xlu0 %1410
    %v1413 = vmul.f32 %v1391, %v1411
    %v1414 = vadd.f32 %v1386, %v1413
    %v1415 = vld [vmem:[%s0] sm:$0x1]
    %v1416 = vpack.c.bf16 %v1415, %v1415
    %v1417 = vld [vmem:[%s14] sm:$0x7]
    %v1418 = vpack.c.bf16 %v1414, %v1414
    %v1419 = vld [vmem:[%s15] sm:$0xf]
    %v1420 = vld [vmem:[%s15 + $0x4] sm:$0xf]
    %v1423 = vunpack.c.l.b16 %v1419
    %v1424 = vunpack.c.l.b16 %v1420
    %v1425 = vpack.c.b16 %v1424, %v1423
    %vm1427 = vcmask 130048
    %v1429 = vsel %vm1427, %v1418, 0
    %1431 = vmatprep.subr.bf16.mxu0 0
    %1432 = vmatpush1.bf16.msra.mxu0 %v1425
    %1433 = vmatprep.subr.bf16.mxu0 0
    %1434 = vmatpush1.bf16.msra.mxu0 0
    %1435 = vmatprep.subr.bf16.mxu0 0
    %1436 = vmatpush1.bf16.msra.mxu0 0
    %1437 = vmatprep.subr.bf16.mxu0 0
    %1438 = vmatpush1.bf16.msra.mxu0 0
    %1439 = vmatprep.subr.bf16.mxu0 0
    %1440 = vmatpush1.bf16.msra.mxu0 0
    %1441 = vmatprep.subr.bf16.mxu0 0
    %1442 = vmatpush1.bf16.msra.mxu0 0
    %1443 = vmatprep.subr.bf16.mxu0 0
    %1444 = vmatpush1.bf16.msra.mxu0 0
    %1445 = vmatprep.subr.bf16.mxu0 0
    %1446 = vmatpush1.bf16.msra.mxu0 0
    %1447 = vmatprep.subr.bf16.mxu0 0
    %1448 = vmatpush1.bf16.msra.mxu0 0
    %1449 = vmatprep.subr.bf16.mxu0 0
    %1450 = vmatpush1.bf16.msra.mxu0 0
    %1451 = vmatprep.subr.bf16.mxu0 0
    %1452 = vmatpush1.bf16.msra.mxu0 0
    %1453 = vmatprep.subr.bf16.mxu0 0
    %1454 = vmatpush1.bf16.msra.mxu0 0
    %1455 = vmatprep.subr.bf16.mxu0 0
    %1456 = vmatpush1.bf16.msra.mxu0 0
    %1457 = vmatprep.subr.bf16.mxu0 0
    %1458 = vmatpush1.bf16.msra.mxu0 0
    %1459 = vmatprep.subr.bf16.mxu0 0
    %1460 = vmatpush1.bf16.msra.mxu0 0
    %1461 = vmatprep.subr.bf16.mxu0 0
    %1462 = vmatpush1.bf16.msra.mxu0 0
    %1463 = vmatprep.mubr.bf16.mxu0 0
    %1464 = vmatmul.mubr.bf16.gmra.mrb[0].mxu0 %v1429
    %v1465 = vpop.f32.mrb[0].mxu0
    %v1466 = vadd.f32 0.0, %v1465
    %v1467 = vpop.f32.mrb[0].mxu0
    %v1468 = vpop.f32.mrb[0].mxu0
    %v1469 = vpop.f32.mrb[0].mxu0
    %1470 = vdwg.mxu0
    %v1472 = vsel %vm110, %v1416, 0
    %v1475 = vsel %vm114, %v1417, 0
    %1477 = vmatprep.subr.bf16.mxu0 0
    %1478 = vmatpush1.bf16.msra.mxu0 %v1475
    %1479 = vmatprep.subr.bf16.mxu0 0
    %1480 = vmatpush1.bf16.msra.mxu0 0
    %1481 = vmatprep.subr.bf16.mxu0 0
    %1482 = vmatpush1.bf16.msra.mxu0 0
    %1483 = vmatprep.subr.bf16.mxu0 0
    %1484 = vmatpush1.bf16.msra.mxu0 0
    %1485 = vmatprep.subr.bf16.mxu0 0
    %1486 = vmatpush1.bf16.msra.mxu0 0
    %1487 = vmatprep.subr.bf16.mxu0 0
    %1488 = vmatpush1.bf16.msra.mxu0 0
    %1489 = vmatprep.subr.bf16.mxu0 0
    %1490 = vmatpush1.bf16.msra.mxu0 0
    %1491 = vmatprep.subr.bf16.mxu0 0
    %1492 = vmatpush1.bf16.msra.mxu0 0
    %1493 = vmatprep.subr.bf16.mxu0 0
    %1494 = vmatpush1.bf16.msra.mxu0 0
    %1495 = vmatprep.subr.bf16.mxu0 0
    %1496 = vmatpush1.bf16.msra.mxu0 0
    %1497 = vmatprep.subr.bf16.mxu0 0
    %1498 = vmatpush1.bf16.msra.mxu0 0
    %1499 = vmatprep.subr.bf16.mxu0 0
    %1500 = vmatpush1.bf16.msra.mxu0 0
    %1501 = vmatprep.subr.bf16.mxu0 0
    %1502 = vmatpush1.bf16.msra.mxu0 0
    %1503 = vmatprep.subr.bf16.mxu0 0
    %1504 = vmatpush1.bf16.msra.mxu0 0
    %1505 = vmatprep.subr.bf16.mxu0 0
    %1506 = vmatpush1.bf16.msra.mxu0 0
    %1507 = vmatprep.subr.bf16.mxu0 0
    %1508 = vmatpush1.bf16.msra.mxu0 0
    %1509 = vmatprep.mubr.bf16.mxu0 0
    %1510 = vmatmul.mubr.bf16.gmra.mrb[0].mxu0 %v1472
    %v1511 = vpop.f32.mrb[0].mxu0
    %v1512 = vadd.f32 %v1466, %v1511
    %v1513 = vpop.f32.mrb[0].mxu0
    %v1514 = vpop.f32.mrb[0].mxu0
    %v1515 = vpop.f32.mrb[0].mxu0
    %1516 = vdwg.mxu0
    %v1517 = vpack.c.bf16 %v213, %v213
    %v1518 = vld [vmem:[%s16] sm:$0xf]
    %v1520 = vsel %vm170, %v1517, 0
    %v1523 = vsel %vm174, %v1518, 0
    %1525 = vmatprep.subr.bf16.mxu0 0
    %1526 = vmatpush1.bf16.msra.mxu0 %v1523
    %1527 = vmatprep.subr.bf16.mxu0 0
    %1528 = vmatpush1.bf16.msra.mxu0 0
    %1529 = vmatprep.subr.bf16.mxu0 0
    %1530 = vmatpush1.bf16.msra.mxu0 0
    %1531 = vmatprep.subr.bf16.mxu0 0
    %1532 = vmatpush1.bf16.msra.mxu0 0
    %1533 = vmatprep.subr.bf16.mxu0 0
    %1534 = vmatpush1.bf16.msra.mxu0 0
    %1535 = vmatprep.subr.bf16.mxu0 0
    %1536 = vmatpush1.bf16.msra.mxu0 0
    %1537 = vmatprep.subr.bf16.mxu0 0
    %1538 = vmatpush1.bf16.msra.mxu0 0
    %1539 = vmatprep.subr.bf16.mxu0 0
    %1540 = vmatpush1.bf16.msra.mxu0 0
    %1541 = vmatprep.subr.bf16.mxu0 0
    %1542 = vmatpush1.bf16.msra.mxu0 0
    %1543 = vmatprep.subr.bf16.mxu0 0
    %1544 = vmatpush1.bf16.msra.mxu0 0
    %1545 = vmatprep.subr.bf16.mxu0 0
    %1546 = vmatpush1.bf16.msra.mxu0 0
    %1547 = vmatprep.subr.bf16.mxu0 0
    %1548 = vmatpush1.bf16.msra.mxu0 0
    %1549 = vmatprep.subr.bf16.mxu0 0
    %1550 = vmatpush1.bf16.msra.mxu0 0
    %1551 = vmatprep.subr.bf16.mxu0 0
    %1552 = vmatpush1.bf16.msra.mxu0 0
    %1553 = vmatprep.subr.bf16.mxu0 0
    %1554 = vmatpush1.bf16.msra.mxu0 0
    %1555 = vmatprep.subr.bf16.mxu0 0
    %1556 = vmatpush1.bf16.msra.mxu0 0
    %1557 = vmatprep.mubr.bf16.mxu0 0
    %1558 = vmatmul.mubr.bf16.gmra.mrb[0].mxu0 %v1520
    %v1559 = vpop.f32.mrb[0].mxu0
    %v1560 = vadd.f32 0.0, %v1559
    %v1561 = vpop.f32.mrb[0].mxu0
    %v1562 = vpop.f32.mrb[0].mxu0
    %v1563 = vpop.f32.mrb[0].mxu0
    %1564 = vdwg.mxu0
    %v1565 = vadd.f32 %v1512, %v1560
    %v1566 = vld [vmem:[%s17] sm:$0x1]
    %v1567 = vadd.f32 %v1565, %v1566
    %v1568 = vtanh.pop %v1567
    %v1569 = vpack.c.bf16 %v1568, %v1568
    %v1570 = vld [vmem:[%s18] sm:$0xf]
    %v1571 = vld [vmem:[%s18 + $0x4] sm:$0xf]
    %v1572 = vld [vmem:[%s18 + $0x8] sm:$0xf]
    %v1573 = vld [vmem:[%s18 + $0xc] sm:$0xf]
    %v1574 = vld [vmem:[%s18 + $0x10] sm:$0xf]
    %v1575 = vld [vmem:[%s18 + $0x14] sm:$0xf]
    %v1576 = vld [vmem:[%s18 + $0x18] sm:$0xf]
    %v1577 = vld [vmem:[%s18 + $0x1c] sm:$0xf]
    %v1578 = vld [vmem:[%s19] sm:$0x1]
    %v1587 = vunpack.c.l.b16 %v1570
    %v1588 = vunpack.c.l.b16 %v1571
    %v1589 = vunpack.c.l.b16 %v1572
    %v1590 = vunpack.c.l.b16 %v1573
    %v1591 = vunpack.c.l.b16 %v1574
    %v1592 = vunpack.c.l.b16 %v1575
    %v1593 = vunpack.c.l.b16 %v1576
    %v1594 = vunpack.c.l.b16 %v1577
    %v1595 = vpack.c.b16 %v1588, %v1587
    %v1596 = vpack.c.b16 %v1590, %v1589
    %v1597 = vpack.c.b16 %v1592, %v1591
    %v1598 = vpack.c.b16 %v1594, %v1593
    %vm1603 = vcmask 523264
    %v1605 = vsel %vm1603, %v1569, 0
    %1607 = vmatprep.subr.bf16.mxu0 0
    %1608 = vmatpush1.bf16.msra.mxu0 %v1595
    %1609 = vmatprep.subr.bf16.mxu0 0
    %1610 = vmatpush1.bf16.msra.mxu0 %v1596
    %1611 = vmatprep.subr.bf16.mxu0 0
    %1612 = vmatpush1.bf16.msra.mxu0 %v1597
    %1613 = vmatprep.subr.bf16.mxu0 0
    %1614 = vmatpush1.bf16.msra.mxu0 %v1598
    %1615 = vmatprep.subr.bf16.mxu0 0
    %1616 = vmatpush1.bf16.msra.mxu0 0
    %1617 = vmatprep.subr.bf16.mxu0 0
    %1618 = vmatpush1.bf16.msra.mxu0 0
    %1619 = vmatprep.subr.bf16.mxu0 0
    %1620 = vmatpush1.bf16.msra.mxu0 0
    %1621 = vmatprep.subr.bf16.mxu0 0
    %1622 = vmatpush1.bf16.msra.mxu0 0
    %1623 = vmatprep.subr.bf16.mxu0 0
    %1624 = vmatpush1.bf16.msra.mxu0 0
    %1625 = vmatprep.subr.bf16.mxu0 0
    %1626 = vmatpush1.bf16.msra.mxu0 0
    %1627 = vmatprep.subr.bf16.mxu0 0
    %1628 = vmatpush1.bf16.msra.mxu0 0
    %1629 = vmatprep.subr.bf16.mxu0 0
    %1630 = vmatpush1.bf16.msra.mxu0 0
    %1631 = vmatprep.subr.bf16.mxu0 0
    %1632 = vmatpush1.bf16.msra.mxu0 0
    %1633 = vmatprep.subr.bf16.mxu0 0
    %1634 = vmatpush1.bf16.msra.mxu0 0
    %1635 = vmatprep.subr.bf16.mxu0 0
    %1636 = vmatpush1.bf16.msra.mxu0 0
    %1637 = vmatprep.subr.bf16.mxu0 0
    %1638 = vmatpush1.bf16.msra.mxu0 0
    %1639 = vmatprep.mubr.bf16.mxu0 0
    %1640 = vmatmul.mubr.bf16.gmra.mrb[0].mxu0 %v1605
    %v1641 = vpop.f32.mrb[0].mxu0
    %v1642 = vadd.f32 %v1578, %v1641
    %v1643 = vpop.f32.mrb[0].mxu0
    %v1644 = vpop.f32.mrb[0].mxu0
    %v1645 = vpop.f32.mrb[0].mxu0
    %1646 = vdwg.mxu0
    %v1647 = vtanh.pop %v1642
    %v1648 = vpack.c.bf16 %v1647, %v1647
    %v1649 = vld [vmem:[%s20] sm:$0xf]
    %v1650 = vld [vmem:[%s20 + $0x4] sm:$0xf]
    %v1651 = vld [vmem:[%s20 + $0x8] sm:$0xf]
    %v1652 = vld [vmem:[%s20 + $0xc] sm:$0xf]
    %v1653 = vld [vmem:[%s20 + $0x10] sm:$0xf]
    %v1654 = vld [vmem:[%s20 + $0x14] sm:$0xf]
    %v1655 = vld [vmem:[%s20 + $0x18] sm:$0xf]
    %v1656 = vld [vmem:[%s20 + $0x1c] sm:$0xf]
    %v1657 = vld [vmem:[%s21] sm:$0x1]
    %v1666 = vunpack.c.l.b16 %v1649
    %v1667 = vunpack.c.l.b16 %v1650
    %v1668 = vunpack.c.l.b16 %v1651
    %v1669 = vunpack.c.l.b16 %v1652
    %v1670 = vunpack.c.l.b16 %v1653
    %v1671 = vunpack.c.l.b16 %v1654
    %v1672 = vunpack.c.l.b16 %v1655
    %v1673 = vunpack.c.l.b16 %v1656
    %v1674 = vpack.c.b16 %v1667, %v1666
    %v1675 = vpack.c.b16 %v1669, %v1668
    %v1676 = vpack.c.b16 %v1671, %v1670
    %v1677 = vpack.c.b16 %v1673, %v1672
    %v1683 = vsel %vm1603, %v1648, 0
    %1685 = vmatprep.subr.bf16.mxu0 0
    %1686 = vmatpush1.bf16.msra.mxu0 %v1674
    %1687 = vmatprep.subr.bf16.mxu0 0
    %1688 = vmatpush1.bf16.msra.mxu0 %v1675
    %1689 = vmatprep.subr.bf16.mxu0 0
    %1690 = vmatpush1.bf16.msra.mxu0 %v1676
    %1691 = vmatprep.subr.bf16.mxu0 0
    %1692 = vmatpush1.bf16.msra.mxu0 %v1677
    %1693 = vmatprep.subr.bf16.mxu0 0
    %1694 = vmatpush1.bf16.msra.mxu0 0
    %1695 = vmatprep.subr.bf16.mxu0 0
    %1696 = vmatpush1.bf16.msra.mxu0 0
    %1697 = vmatprep.subr.bf16.mxu0 0
    %1698 = vmatpush1.bf16.msra.mxu0 0
    %1699 = vmatprep.subr.bf16.mxu0 0
    %1700 = vmatpush1.bf16.msra.mxu0 0
    %1701 = vmatprep.subr.bf16.mxu0 0
    %1702 = vmatpush1.bf16.msra.mxu0 0
    %1703 = vmatprep.subr.bf16.mxu0 0
    %1704 = vmatpush1.bf16.msra.mxu0 0
    %1705 = vmatprep.subr.bf16.mxu0 0
    %1706 = vmatpush1.bf16.msra.mxu0 0
    %1707 = vmatprep.subr.bf16.mxu0 0
    %1708 = vmatpush1.bf16.msra.mxu0 0
    %1709 = vmatprep.subr.bf16.mxu0 0
    %1710 = vmatpush1.bf16.msra.mxu0 0
    %1711 = vmatprep.subr.bf16.mxu0 0
    %1712 = vmatpush1.bf16.msra.mxu0 0
    %1713 = vmatprep.subr.bf16.mxu0 0
    %1714 = vmatpush1.bf16.msra.mxu0 0
    %1715 = vmatprep.subr.bf16.mxu0 0
    %1716 = vmatpush1.bf16.msra.mxu0 0
    %1717 = vmatprep.mubr.bf16.mxu0 0
    %1718 = vmatmul.mubr.bf16.gmra.mrb[0].mxu0 %v1683
    %v1719 = vpop.f32.mrb[0].mxu0
    %v1720 = vadd.f32 %v1657, %v1719
    %v1721 = vpop.f32.mrb[0].mxu0
    %v1722 = vpop.f32.mrb[0].mxu0
    %v1723 = vpop.f32.mrb[0].mxu0
    %1724 = vdwg.mxu0
    %1725 = vst [vmem:[%s22] sm:$0x1] %v1720
    // Predicated region
    $region98: #{polkadot_forward.1} parent=1 // pred_check
      _
    $region99: #{polkadot_forward.1} parent=1 // pred_check_branch
      %1727 = sbr.rel (0) target = $region101
    $region100: #{polkadot_forward.1} parent=1 // pred_region
      _
    $region101: #{polkadot_forward.1} parent=1 // pred_fallthru
      _
    // Predicated region
    $region102: #{polkadot_forward.1} parent=1 // pred_check
      _
    $region103: #{polkadot_forward.1} parent=1 // pred_check_branch
      %1729 = sbr.rel (0) target = $region105
    $region104: #{polkadot_forward.1} parent=1 // pred_region
      _
    $region105: #{polkadot_forward.1} parent=1 // pred_fallthru
      _
    %1730 = vsyncpa [#allocation3], 1
    %1731 = vsyncpa [#allocation5], 1

</llo_original>
